<compile_context>
chip_gen: v7x
topology: tpu7x:2x2x1
jax: 0.10.0
libtpu: 0.0.40
codegen_flags: <defaults>
</compile_context>

<pallas_src>
import functools

import jax
import jax.numpy as jnp
from jax import lax
from jax.experimental import pallas as pl
from jax.experimental.pallas import tpu as pltpu


class hp:
    vocab_size = 32
    embedding_dim = 16
    hidden_dim = 32
    num_layers = 2
    target_dim = 4


LANES = 128
OUT_COLS = ((hp.target_dim + LANES - 1) // LANES) * LANES  # lane-dense head output width


# ----------------------------------------------------------------------------
# Fused Pallas kernel: embedding + 2 wavefront-interleaved LSTM layers + head
# ----------------------------------------------------------------------------
def fused_lstm_head_kernel(tok_ref, ew0_ref, b0_ref, wbig_ref, whh1_ref, b1_ref,
                           wout_ref, bout_ref, o_ref, *, batch):
    """All refs are VMEM-resident; one program handles one batch tile.

    tok_ref : (N, 1)    int32  token ids, time-major rows (row n = t*batch + b)
    ew0_ref : (V, 4H)   bf16   embedding folded into layer-0 input proj (emb @ W_ih0^T)
    b0_ref  : (1, 4H)   f32    b_ih0 + b_hh0
    wbig_ref: (H, 8H)   bf16   [W_hh0^T | W_ih1^T]
    whh1_ref: (H, 4H)   bf16   W_hh1^T
    b1_ref  : (1, 4H)   f32    b_ih1 + b_hh1
    wout_ref: (H, 128)  bf16   W_out^T, columns [target_dim, 128) zero
    bout_ref: (1, 128)  f32    b_out, zero-padded
    o_ref   : (N, 128)  f32    sigmoid(head), time-major rows, lane-dense
    Gate order follows PyTorch: i, f, g, o.
    """
    f32, bf16 = jnp.float32, jnp.bfloat16
    N = tok_ref.shape[0]
    T = N // batch
    V = ew0_ref.shape[0]
    H = whh1_ref.shape[0]
    G = 4 * H

    wbig = wbig_ref[...]
    whh1 = whh1_ref[...]
    wout = wout_ref[...]
    b1 = b1_ref[...]
    bout = bout_ref[...]

    # Embedding lookup fused with layer-0's input projection: one MXU pass (exact —
    # the one-hot picks a bf16-rounded row of ew0).
    tok = tok_ref[...]                                                      # (N, 1)
    onehot = (lax.broadcasted_iota(jnp.int32, (N, V), 1) == tok).astype(bf16)
    xw0 = jnp.dot(onehot, ew0_ref[...], preferred_element_type=f32) + b0_ref[...]
    # Pre-split into per-step slices: sublane extraction hoisted off the recurrence.
    xw0_t = [xw0[t * batch:(t + 1) * batch, :] for t in range(T)]

    def cell(gates, c):
        sig = jax.nn.sigmoid(gates)      # full-vreg EUP (i, f, o lanes used)
        tnh = jnp.tanh(gates)            # full-vreg EUP (g lanes used)
        i_g = sig[:, 0 * H:1 * H]
        f_g = sig[:, 1 * H:2 * H]
        g_g = tnh[:, 2 * H:3 * H]
        o_g = sig[:, 3 * H:4 * H]
        c_new = f_g * c + i_g * g_g
        h_new = o_g * jnp.tanh(c_new)
        return h_new, c_new

    h0 = jnp.zeros((batch, H), f32); c0 = jnp.zeros((batch, H), f32)
    h1 = jnp.zeros((batch, H), f32); c1 = jnp.zeros((batch, H), f32)

    # Wavefront over the two layers: at step w, layer 0 runs t=w and layer 1 runs
    # t=w-1 (its input is the *current* h0).  The two cells only depend on state from
    # the previous wavefront step, so their MXU/EUP latencies overlap.
    for w in range(T + 1):                                       # fully unrolled
        if w == 0:
            h0, c0 = cell(xw0_t[0], c0)                          # h0==0: no recurrent term
            continue

        # One push yields layer-0's recurrent term (lanes [0,4H)) and layer-1's input
        # term (lanes [4H,8H)); both slices are 128-lane aligned.
        both = jnp.dot(h0.astype(bf16), wbig, preferred_element_type=f32)   # (B, 8H)
        g1 = both[:, G:] + b1
        if w >= 2:                                               # h1 == 0 at w == 1
            g1 = g1 + jnp.dot(h1.astype(bf16), whh1, preferred_element_type=f32)
        if w < T:
            h0, c0 = cell(xw0_t[w] + both[:, :G], c0)
        h1, c1 = cell(g1, c1)

        # Head for time step w-1: tiny matmul + lane-dense store, off the recurrence
        # chain (nothing downstream reads them).
        t_out = w - 1
        logits = jnp.dot(h1.astype(bf16), wout, preferred_element_type=f32) + bout
        o_ref[t_out * batch:(t_out + 1) * batch, :] = jax.nn.sigmoid(logits)


# ----------------------------------------------------------------------------
# Parameter construction / packing (done once, outside the jitted forward)
# ----------------------------------------------------------------------------
def init_params(key):
    """Deterministic synthetic parameters matching nn.Embedding / nn.LSTM / nn.Linear shapes."""
    H, E, V, L, O = hp.hidden_dim, hp.embedding_dim, hp.vocab_size, hp.num_layers, hp.target_dim
    keys = jax.random.split(key, 2 + 4 * L + 2)
    ki = iter(keys)
    scale = 1.0 / jnp.sqrt(jnp.float32(H))

    params = {"embedding": jax.random.normal(next(ki), (V, E), jnp.float32) * 0.1}

    lstm_layers = []
    for layer in range(L):
        d_in = E if layer == 0 else H
        lstm_layers.append({
            "w_ih": jax.random.uniform(next(ki), (4 * H, d_in), jnp.float32, -scale, scale),
            "w_hh": jax.random.uniform(next(ki), (4 * H, H), jnp.float32, -scale, scale),
            "b_ih": jax.random.uniform(next(ki), (4 * H,), jnp.float32, -scale, scale),
            "b_hh": jax.random.uniform(next(ki), (4 * H,), jnp.float32, -scale, scale),
        })
    params["lstm"] = lstm_layers
    params["w_out"] = jax.random.uniform(next(ki), (O, H), jnp.float32, -scale, scale)
    params["b_out"] = jax.random.uniform(next(ki), (O,), jnp.float32, -scale, scale)
    return params


def pack_params(params):
    """Fold / transpose / pad / cast weights into the kernel-ready layout (runs once)."""
    H, E, V, O, L = hp.hidden_dim, hp.embedding_dim, hp.vocab_size, hp.target_dim, hp.num_layers
    assert L == 2, "kernel wavefront-schedules exactly two LSTM layers"
    f32, bf16 = jnp.float32, jnp.bfloat16
    l0, l1 = params["lstm"]

    emb = params["embedding"].astype(f32)                                        # (V, E)
    ew0 = jnp.dot(emb, l0["w_ih"].astype(f32).T).astype(bf16)                    # (V, 4H) folded
    b0 = (l0["b_ih"] + l0["b_hh"]).astype(f32).reshape(1, 4 * H)

    wbig = jnp.concatenate([l0["w_hh"].astype(f32).T,                            # (H, 4H)
                            l1["w_ih"].astype(f32).T], axis=1).astype(bf16)      # (H, 8H)
    whh1 = l1["w_hh"].astype(f32).T.astype(bf16)                                 # (H, 4H)
    b1 = (l1["b_ih"] + l1["b_hh"]).astype(f32).reshape(1, 4 * H)

    wout = (jnp.zeros((H, OUT_COLS), f32)
            .at[:, :O].set(params["w_out"].astype(f32).T).astype(bf16))          # (H, 128)
    bout = jnp.zeros((1, OUT_COLS), f32).at[:, :O].set(
        params["b_out"].astype(f32).reshape(1, O))

    return {"ew0": ew0, "b0": b0, "wbig": wbig, "whh1": whh1, "b1": b1,
            "wout": wout, "bout": bout}


# ----------------------------------------------------------------------------
# Forward pass
# ----------------------------------------------------------------------------
@jax.jit
def lstm_head_forward(packed, tokens):
    """tokens: (B, T) int -> (B, T, target_dim) f32, matching the PyTorch forward."""
    B, T = tokens.shape
    O = hp.target_dim
    TB = 8 if B % 8 == 0 else B          # batch tile per program (grid scales on v7x)
    num_tiles = B // TB
    n_tile = T * TB

    # (B, T) -> (num_tiles, T*TB, 1): time-major rows inside each batch tile.
    tok_tiles = jnp.transpose(tokens.astype(jnp.int32).reshape(num_tiles, TB, T),
                              (0, 2, 1)).reshape(num_tiles, n_tile, 1)

    def full_spec(arr):
        zero = (0,) * arr.ndim
        return pl.BlockSpec(arr.shape, lambda i, z=zero: z)

    out = pl.pallas_call(
        functools.partial(fused_lstm_head_kernel, batch=TB),
        grid=(num_tiles,),
        out_shape=jax.ShapeDtypeStruct((num_tiles, n_tile, OUT_COLS), jnp.float32),
        in_specs=[
            pl.BlockSpec((None, n_tile, 1), lambda i: (i, 0, 0)),
            full_spec(packed["ew0"]),
            full_spec(packed["b0"]),
            full_spec(packed["wbig"]),
            full_spec(packed["whh1"]),
            full_spec(packed["b1"]),
            full_spec(packed["wout"]),
            full_spec(packed["bout"]),
        ],
        out_specs=pl.BlockSpec((None, n_tile, OUT_COLS), lambda i: (i, 0, 0)),
        compiler_params=pltpu.CompilerParams(dimension_semantics=("parallel",)),
    )(tok_tiles, packed["ew0"], packed["b0"], packed["wbig"], packed["whh1"],
      packed["b1"], packed["wout"], packed["bout"])

    # (num_tiles, T*TB, 128) -> (B, T, target_dim)
    y = out[:, :, :O].reshape(num_tiles, T, TB, O)
    y = jnp.transpose(y, (0, 2, 1, 3)).reshape(B, T, O)
    return y


def reference_forward(params, tokens):
    """Pure-JAX f32 reference (same semantics as the PyTorch module)."""
    B, T = tokens.shape
    H = hp.hidden_dim
    x = jnp.take(params["embedding"], tokens, axis=0)                 # (B, T, E)

    for lp in params["lstm"]:
        wih_t = lp["w_ih"].T
        whh_t = lp["w_hh"].T
        b = lp["b_ih"] + lp["b_hh"]

        def step(carry, x_t):
            h, c = carry
            g = x_t @ wih_t + h @ whh_t + b
            i = jax.nn.sigmoid(g[:, 0 * H:1 * H])
            f = jax.nn.sigmoid(g[:, 1 * H:2 * H])
            gg = jnp.tanh(g[:, 2 * H:3 * H])
            o = jax.nn.sigmoid(g[:, 3 * H:4 * H])
            c = f * c + i * gg
            h = o * jnp.tanh(c)
            return (h, c), h

        h0 = jnp.zeros((B, H), jnp.float32)
        c0 = jnp.zeros((B, H), jnp.float32)
        _, ys = lax.scan(step, (h0, c0), jnp.transpose(x, (1, 0, 2)))
        x = jnp.transpose(ys, (1, 0, 2))                              # (B, T, H)

    return jax.nn.sigmoid(x @ params["w_out"].T + params["b_out"])


if __name__ == "__main__":
    key = jax.random.PRNGKey(0)
    pkey, tkey = jax.random.split(key)
    params = init_params(pkey)
    packed = pack_params(params)

    batch, seq = 2, 8
    tokens = jax.random.randint(tkey, (batch, seq), 0, hp.vocab_size, dtype=jnp.int32)

    out = jax.block_until_ready(lstm_head_forward(packed, tokens))
    assert out.shape == (batch, seq, hp.target_dim), out.shape

    ref = jax.block_until_ready(reference_forward(params, tokens))
    # bf16 matmul operands (f32 accumulate) -> ~1e-3-level deviations expected.
    assert jnp.allclose(out, ref, atol=2e-2, rtol=2e-2), "mismatch vs reference"

    print("KERNEL_OK")
</pallas_src>

<mosaic_0001>
module attributes {stable_mosaic.version = 11 : i64} {
  func.func @fused_lstm_head_kernel(%arg0: i32, %arg1: memref<1x16x1xi32, #tpu.memory_space<vmem>>, %arg2: memref<32x128xbf16, #tpu.memory_space<vmem>>, %arg3: memref<1x128xf32, #tpu.memory_space<vmem>>, %arg4: memref<32x256xbf16, #tpu.memory_space<vmem>>, %arg5: memref<32x128xbf16, #tpu.memory_space<vmem>>, %arg6: memref<1x128xf32, #tpu.memory_space<vmem>>, %arg7: memref<32x128xbf16, #tpu.memory_space<vmem>>, %arg8: memref<1x128xf32, #tpu.memory_space<vmem>>, %arg9: memref<1x16x128xf32, #tpu.memory_space<vmem>>) attributes {dimension_semantics = [#tpu.dimension_semantics<parallel>], iteration_bounds = array<i64: 1>, scalar_prefetch = 0 : i64, scratch_operands = 0 : i64, tpu.core_type = #tpu.core_type<tc>, window_params = [{transform_indices = @transform_0, window_bounds = array<i64: 1, 16, 1>}, {pipeline_mode = #tpu.pipeline_mode<synchronous>, transform_indices = @transform_1, window_bounds = array<i64: 32, 128>}, {pipeline_mode = #tpu.pipeline_mode<synchronous>, transform_indices = @transform_2, window_bounds = array<i64: 1, 128>}, {pipeline_mode = #tpu.pipeline_mode<synchronous>, transform_indices = @transform_3, window_bounds = array<i64: 32, 256>}, {pipeline_mode = #tpu.pipeline_mode<synchronous>, transform_indices = @transform_4, window_bounds = array<i64: 32, 128>}, {pipeline_mode = #tpu.pipeline_mode<synchronous>, transform_indices = @transform_5, window_bounds = array<i64: 1, 128>}, {pipeline_mode = #tpu.pipeline_mode<synchronous>, transform_indices = @transform_6, window_bounds = array<i64: 32, 128>}, {pipeline_mode = #tpu.pipeline_mode<synchronous>, transform_indices = @transform_7, window_bounds = array<i64: 1, 128>}, {transform_indices = @transform_8, window_bounds = array<i64: 1, 16, 128>}]} {
    %c0 = arith.constant 0 : index
    %c0_0 = arith.constant 0 : index
    %0 = vector.load %arg4[%c0, %c0_0] : memref<32x256xbf16, #tpu.memory_space<vmem>>, vector<32x256xbf16>
    %c0_1 = arith.constant 0 : index
    %c0_2 = arith.constant 0 : index
    %1 = vector.load %arg5[%c0_1, %c0_2] : memref<32x128xbf16, #tpu.memory_space<vmem>>, vector<32x128xbf16>
    %c0_3 = arith.constant 0 : index
    %c0_4 = arith.constant 0 : index
    %2 = vector.load %arg7[%c0_3, %c0_4] : memref<32x128xbf16, #tpu.memory_space<vmem>>, vector<32x128xbf16>
    %c0_5 = arith.constant 0 : index
    %c0_6 = arith.constant 0 : index
    %3 = vector.load %arg6[%c0_5, %c0_6] : memref<1x128xf32, #tpu.memory_space<vmem>>, vector<1x128xf32>
    %c0_7 = arith.constant 0 : index
    %c0_8 = arith.constant 0 : index
    %4 = vector.load %arg8[%c0_7, %c0_8] : memref<1x128xf32, #tpu.memory_space<vmem>>, vector<1x128xf32>
    %c0_9 = arith.constant 0 : index
    %c0_10 = arith.constant 0 : index
    %c0_11 = arith.constant 0 : index
    %5 = vector.load %arg1[%c0_9, %c0_10, %c0_11] : memref<1x16x1xi32, #tpu.memory_space<vmem>>, vector<1x16x1xi32>
    %6 = vector.shape_cast %5 : vector<1x16x1xi32> to vector<16x1xi32>
    %7 = tpu.iota {dimensions = array<i32: 1>} : vector<16x32xi32>
    %8 = vector.broadcast %6 : vector<16x1xi32> to vector<16x32xi32>
    %9 = arith.cmpi eq, %7, %8 : vector<16x32xi32>
    %10 = arith.extui %9 : vector<16x32xi1> to vector<16x32xi32>
    %11 = arith.sitofp %10 : vector<16x32xi32> to vector<16x32xf32>
    %12 = arith.truncf %11 : vector<16x32xf32> to vector<16x32xbf16>
    %c0_12 = arith.constant 0 : index
    %c0_13 = arith.constant 0 : index
    %13 = vector.load %arg2[%c0_12, %c0_13] : memref<32x128xbf16, #tpu.memory_space<vmem>>, vector<32x128xbf16>
    %cst = arith.constant dense<0.000000e+00> : vector<16x128xf32>
    %14 = tpu.matmul %12, %13, %cst {dimension_numbers = #tpu.dot_dimension_numbers<[1], [0], [0], [1], [0, 0, 1, 1], [], []>} : vector<16x32xbf16>, vector<32x128xbf16>, vector<16x128xf32> -> vector<16x128xf32>
    %c0_14 = arith.constant 0 : index
    %c0_15 = arith.constant 0 : index
    %15 = vector.load %arg3[%c0_14, %c0_15] : memref<1x128xf32, #tpu.memory_space<vmem>>, vector<1x128xf32>
    %16 = vector.broadcast %15 : vector<1x128xf32> to vector<16x128xf32>
    %17 = arith.addf %14, %16 : vector<16x128xf32>
    %18 = vector.extract_strided_slice %17 {offsets = [0, 0], sizes = [2, 128], strides = [1, 1]} : vector<16x128xf32> to vector<2x128xf32>
    %19 = vector.extract_strided_slice %17 {offsets = [2, 0], sizes = [2, 128], strides = [1, 1]} : vector<16x128xf32> to vector<2x128xf32>
    %20 = vector.extract_strided_slice %17 {offsets = [4, 0], sizes = [2, 128], strides = [1, 1]} : vector<16x128xf32> to vector<2x128xf32>
    %21 = vector.extract_strided_slice %17 {offsets = [6, 0], sizes = [2, 128], strides = [1, 1]} : vector<16x128xf32> to vector<2x128xf32>
    %22 = vector.extract_strided_slice %17 {offsets = [8, 0], sizes = [2, 128], strides = [1, 1]} : vector<16x128xf32> to vector<2x128xf32>
    %23 = vector.extract_strided_slice %17 {offsets = [10, 0], sizes = [2, 128], strides = [1, 1]} : vector<16x128xf32> to vector<2x128xf32>
    %24 = vector.extract_strided_slice %17 {offsets = [12, 0], sizes = [2, 128], strides = [1, 1]} : vector<16x128xf32> to vector<2x128xf32>
    %25 = vector.extract_strided_slice %17 {offsets = [14, 0], sizes = [2, 128], strides = [1, 1]} : vector<16x128xf32> to vector<2x128xf32>
    %cst_16 = arith.constant 0.000000e+00 : f32
    %26 = vector.broadcast %cst_16 : f32 to vector<2x32xf32>
    %cst_17 = arith.constant 0.000000e+00 : f32
    %27 = vector.broadcast %cst_17 : f32 to vector<2x32xf32>
    %28 = arith.negf %18 : vector<2x128xf32>
    %29 = math.exp %28 : vector<2x128xf32>
    %cst_18 = arith.constant 1.000000e+00 : f32
    %30 = vector.broadcast %cst_18 : f32 to vector<2x128xf32>
    %31 = arith.addf %30, %29 : vector<2x128xf32>
    %32 = arith.divf %30, %31 : vector<2x128xf32>
    %33 = math.tanh %18 : vector<2x128xf32>
    %34 = vector.extract_strided_slice %32 {offsets = [0, 0], sizes = [2, 32], strides = [1, 1]} : vector<2x128xf32> to vector<2x32xf32>
    %35 = vector.extract_strided_slice %32 {offsets = [0, 32], sizes = [2, 32], strides = [1, 1]} : vector<2x128xf32> to vector<2x32xf32>
    %36 = vector.extract_strided_slice %33 {offsets = [0, 64], sizes = [2, 32], strides = [1, 1]} : vector<2x128xf32> to vector<2x32xf32>
    %37 = vector.extract_strided_slice %32 {offsets = [0, 96], sizes = [2, 32], strides = [1, 1]} : vector<2x128xf32> to vector<2x32xf32>
    %38 = arith.mulf %35, %26 : vector<2x32xf32>
    %39 = arith.mulf %34, %36 : vector<2x32xf32>
    %40 = arith.addf %38, %39 : vector<2x32xf32>
    %41 = math.tanh %40 : vector<2x32xf32>
    %42 = arith.mulf %37, %41 : vector<2x32xf32>
    %43 = arith.truncf %42 : vector<2x32xf32> to vector<2x32xbf16>
    %cst_19 = arith.constant dense<0.000000e+00> : vector<2x256xf32>
    %44 = tpu.matmul %43, %0, %cst_19 {dimension_numbers = #tpu.dot_dimension_numbers<[1], [0], [0], [1], [0, 0, 1, 1], [], []>} : vector<2x32xbf16>, vector<32x256xbf16>, vector<2x256xf32> -> vector<2x256xf32>
    %45 = vector.extract_strided_slice %44 {offsets = [0, 128], sizes = [2, 128], strides = [1, 1]} : vector<2x256xf32> to vector<2x128xf32>
    %46 = vector.broadcast %3 : vector<1x128xf32> to vector<2x128xf32>
    %47 = arith.addf %45, %46 : vector<2x128xf32>
    %48 = vector.extract_strided_slice %44 {offsets = [0, 0], sizes = [2, 128], strides = [1, 1]} : vector<2x256xf32> to vector<2x128xf32>
    %49 = arith.addf %19, %48 : vector<2x128xf32>
    %50 = arith.negf %49 : vector<2x128xf32>
    %51 = math.exp %50 : vector<2x128xf32>
    %cst_20 = arith.constant 1.000000e+00 : f32
    %52 = vector.broadcast %cst_20 : f32 to vector<2x128xf32>
    %53 = arith.addf %52, %51 : vector<2x128xf32>
    %54 = arith.divf %52, %53 : vector<2x128xf32>
    %55 = math.tanh %49 : vector<2x128xf32>
    %56 = vector.extract_strided_slice %54 {offsets = [0, 0], sizes = [2, 32], strides = [1, 1]} : vector<2x128xf32> to vector<2x32xf32>
    %57 = vector.extract_strided_slice %54 {offsets = [0, 32], sizes = [2, 32], strides = [1, 1]} : vector<2x128xf32> to vector<2x32xf32>
    %58 = vector.extract_strided_slice %55 {offsets = [0, 64], sizes = [2, 32], strides = [1, 1]} : vector<2x128xf32> to vector<2x32xf32>
    %59 = vector.extract_strided_slice %54 {offsets = [0, 96], sizes = [2, 32], strides = [1, 1]} : vector<2x128xf32> to vector<2x32xf32>
    %60 = arith.mulf %57, %40 : vector<2x32xf32>
    %61 = arith.mulf %56, %58 : vector<2x32xf32>
    %62 = arith.addf %60, %61 : vector<2x32xf32>
    %63 = math.tanh %62 : vector<2x32xf32>
    %64 = arith.mulf %59, %63 : vector<2x32xf32>
    %65 = arith.negf %47 : vector<2x128xf32>
    %66 = math.exp %65 : vector<2x128xf32>
    %cst_21 = arith.constant 1.000000e+00 : f32
    %67 = vector.broadcast %cst_21 : f32 to vector<2x128xf32>
    %68 = arith.addf %67, %66 : vector<2x128xf32>
    %69 = arith.divf %67, %68 : vector<2x128xf32>
    %70 = math.tanh %47 : vector<2x128xf32>
    %71 = vector.extract_strided_slice %69 {offsets = [0, 0], sizes = [2, 32], strides = [1, 1]} : vector<2x128xf32> to vector<2x32xf32>
    %72 = vector.extract_strided_slice %69 {offsets = [0, 32], sizes = [2, 32], strides = [1, 1]} : vector<2x128xf32> to vector<2x32xf32>
    %73 = vector.extract_strided_slice %70 {offsets = [0, 64], sizes = [2, 32], strides = [1, 1]} : vector<2x128xf32> to vector<2x32xf32>
    %74 = vector.extract_strided_slice %69 {offsets = [0, 96], sizes = [2, 32], strides = [1, 1]} : vector<2x128xf32> to vector<2x32xf32>
    %75 = arith.mulf %72, %27 : vector<2x32xf32>
    %76 = arith.mulf %71, %73 : vector<2x32xf32>
    %77 = arith.addf %75, %76 : vector<2x32xf32>
    %78 = math.tanh %77 : vector<2x32xf32>
    %79 = arith.mulf %74, %78 : vector<2x32xf32>
    %80 = arith.truncf %79 : vector<2x32xf32> to vector<2x32xbf16>
    %cst_22 = arith.constant dense<0.000000e+00> : vector<2x128xf32>
    %81 = tpu.matmul %80, %2, %cst_22 {dimension_numbers = #tpu.dot_dimension_numbers<[1], [0], [0], [1], [0, 0, 1, 1], [], []>} : vector<2x32xbf16>, vector<32x128xbf16>, vector<2x128xf32> -> vector<2x128xf32>
    %82 = vector.broadcast %4 : vector<1x128xf32> to vector<2x128xf32>
    %83 = arith.addf %81, %82 : vector<2x128xf32>
    %84 = arith.negf %83 : vector<2x128xf32>
    %85 = math.exp %84 : vector<2x128xf32>
    %cst_23 = arith.constant 1.000000e+00 : f32
    %86 = vector.broadcast %cst_23 : f32 to vector<2x128xf32>
    %87 = arith.addf %86, %85 : vector<2x128xf32>
    %88 = arith.divf %86, %87 : vector<2x128xf32>
    %c0_24 = arith.constant 0 : index
    %c0_25 = arith.constant 0 : index
    %c0_26 = arith.constant 0 : index
    %89 = vector.load %arg9[%c0_24, %c0_25, %c0_26] : memref<1x16x128xf32, #tpu.memory_space<vmem>>, vector<1x2x128xf32>
    %90 = vector.shape_cast %89 : vector<1x2x128xf32> to vector<2x128xf32>
    %91 = vector.shape_cast %88 : vector<2x128xf32> to vector<1x2x128xf32>
    tpu.vector_store %arg9[%c0_24, %c0_25, %c0_26], %91 {strides = array<i32>} : memref<1x16x128xf32, #tpu.memory_space<vmem>>, vector<1x2x128xf32>,
    %92 = arith.truncf %64 : vector<2x32xf32> to vector<2x32xbf16>
    %cst_27 = arith.constant dense<0.000000e+00> : vector<2x256xf32>
    %93 = tpu.matmul %92, %0, %cst_27 {dimension_numbers = #tpu.dot_dimension_numbers<[1], [0], [0], [1], [0, 0, 1, 1], [], []>} : vector<2x32xbf16>, vector<32x256xbf16>, vector<2x256xf32> -> vector<2x256xf32>
    %94 = vector.extract_strided_slice %93 {offsets = [0, 128], sizes = [2, 128], strides = [1, 1]} : vector<2x256xf32> to vector<2x128xf32>
    %95 = vector.broadcast %3 : vector<1x128xf32> to vector<2x128xf32>
    %96 = arith.addf %94, %95 : vector<2x128xf32>
    %97 = arith.truncf %79 : vector<2x32xf32> to vector<2x32xbf16>
    %cst_28 = arith.constant dense<0.000000e+00> : vector<2x128xf32>
    %98 = tpu.matmul %97, %1, %cst_28 {dimension_numbers = #tpu.dot_dimension_numbers<[1], [0], [0], [1], [0, 0, 1, 1], [], []>} : vector<2x32xbf16>, vector<32x128xbf16>, vector<2x128xf32> -> vector<2x128xf32>
    %99 = arith.addf %96, %98 : vector<2x128xf32>
    %100 = vector.extract_strided_slice %93 {offsets = [0, 0], sizes = [2, 128], strides = [1, 1]} : vector<2x256xf32> to vector<2x128xf32>
    %101 = arith.addf %20, %100 : vector<2x128xf32>
    %102 = arith.negf %101 : vector<2x128xf32>
    %103 = math.exp %102 : vector<2x128xf32>
    %cst_29 = arith.constant 1.000000e+00 : f32
    %104 = vector.broadcast %cst_29 : f32 to vector<2x128xf32>
    %105 = arith.addf %104, %103 : vector<2x128xf32>
    %106 = arith.divf %104, %105 : vector<2x128xf32>
    %107 = math.tanh %101 : vector<2x128xf32>
    %108 = vector.extract_strided_slice %106 {offsets = [0, 0], sizes = [2, 32], strides = [1, 1]} : vector<2x128xf32> to vector<2x32xf32>
    %109 = vector.extract_strided_slice %106 {offsets = [0, 32], sizes = [2, 32], strides = [1, 1]} : vector<2x128xf32> to vector<2x32xf32>
    %110 = vector.extract_strided_slice %107 {offsets = [0, 64], sizes = [2, 32], strides = [1, 1]} : vector<2x128xf32> to vector<2x32xf32>
    %111 = vector.extract_strided_slice %106 {offsets = [0, 96], sizes = [2, 32], strides = [1, 1]} : vector<2x128xf32> to vector<2x32xf32>
    %112 = arith.mulf %109, %62 : vector<2x32xf32>
    %113 = arith.mulf %108, %110 : vector<2x32xf32>
    %114 = arith.addf %112, %113 : vector<2x32xf32>
    %115 = math.tanh %114 : vector<2x32xf32>
    %116 = arith.mulf %111, %115 : vector<2x32xf32>
    %117 = arith.negf %99 : vector<2x128xf32>
    %118 = math.exp %117 : vector<2x128xf32>
    %cst_30 = arith.constant 1.000000e+00 : f32
    %119 = vector.broadcast %cst_30 : f32 to vector<2x128xf32>
    %120 = arith.addf %119, %118 : vector<2x128xf32>
    %121 = arith.divf %119, %120 : vector<2x128xf32>
    %122 = math.tanh %99 : vector<2x128xf32>
    %123 = vector.extract_strided_slice %121 {offsets = [0, 0], sizes = [2, 32], strides = [1, 1]} : vector<2x128xf32> to vector<2x32xf32>
    %124 = vector.extract_strided_slice %121 {offsets = [0, 32], sizes = [2, 32], strides = [1, 1]} : vector<2x128xf32> to vector<2x32xf32>
    %125 = vector.extract_strided_slice %122 {offsets = [0, 64], sizes = [2, 32], strides = [1, 1]} : vector<2x128xf32> to vector<2x32xf32>
    %126 = vector.extract_strided_slice %121 {offsets = [0, 96], sizes = [2, 32], strides = [1, 1]} : vector<2x128xf32> to vector<2x32xf32>
    %127 = arith.mulf %124, %77 : vector<2x32xf32>
    %128 = arith.mulf %123, %125 : vector<2x32xf32>
    %129 = arith.addf %127, %128 : vector<2x32xf32>
    %130 = math.tanh %129 : vector<2x32xf32>
    %131 = arith.mulf %126, %130 : vector<2x32xf32>
    %132 = arith.truncf %131 : vector<2x32xf32> to vector<2x32xbf16>
    %cst_31 = arith.constant dense<0.000000e+00> : vector<2x128xf32>
    %133 = tpu.matmul %132, %2, %cst_31 {dimension_numbers = #tpu.dot_dimension_numbers<[1], [0], [0], [1], [0, 0, 1, 1], [], []>} : vector<2x32xbf16>, vector<32x128xbf16>, vector<2x128xf32> -> vector<2x128xf32>
    %134 = vector.broadcast %4 : vector<1x128xf32> to vector<2x128xf32>
    %135 = arith.addf %133, %134 : vector<2x128xf32>
    %136 = arith.negf %135 : vector<2x128xf32>
    %137 = math.exp %136 : vector<2x128xf32>
    %cst_32 = arith.constant 1.000000e+00 : f32
    %138 = vector.broadcast %cst_32 : f32 to vector<2x128xf32>
    %139 = arith.addf %138, %137 : vector<2x128xf32>
    %140 = arith.divf %138, %139 : vector<2x128xf32>
    %c0_33 = arith.constant 0 : index
    %c2 = arith.constant 2 : index
    %c0_34 = arith.constant 0 : index
    %141 = vector.load %arg9[%c0_33, %c2, %c0_34] : memref<1x16x128xf32, #tpu.memory_space<vmem>>, vector<1x2x128xf32>
    %142 = vector.shape_cast %141 : vector<1x2x128xf32> to vector<2x128xf32>
    %143 = vector.shape_cast %140 : vector<2x128xf32> to vector<1x2x128xf32>
    tpu.vector_store %arg9[%c0_33, %c2, %c0_34], %143 {strides = array<i32>} : memref<1x16x128xf32, #tpu.memory_space<vmem>>, vector<1x2x128xf32>,
    %144 = arith.truncf %116 : vector<2x32xf32> to vector<2x32xbf16>
    %cst_35 = arith.constant dense<0.000000e+00> : vector<2x256xf32>
    %145 = tpu.matmul %144, %0, %cst_35 {dimension_numbers = #tpu.dot_dimension_numbers<[1], [0], [0], [1], [0, 0, 1, 1], [], []>} : vector<2x32xbf16>, vector<32x256xbf16>, vector<2x256xf32> -> vector<2x256xf32>
    %146 = vector.extract_strided_slice %145 {offsets = [0, 128], sizes = [2, 128], strides = [1, 1]} : vector<2x256xf32> to vector<2x128xf32>
    %147 = vector.broadcast %3 : vector<1x128xf32> to vector<2x128xf32>
    %148 = arith.addf %146, %147 : vector<2x128xf32>
    %149 = arith.truncf %131 : vector<2x32xf32> to vector<2x32xbf16>
    %cst_36 = arith.constant dense<0.000000e+00> : vector<2x128xf32>
    %150 = tpu.matmul %149, %1, %cst_36 {dimension_numbers = #tpu.dot_dimension_numbers<[1], [0], [0], [1], [0, 0, 1, 1], [], []>} : vector<2x32xbf16>, vector<32x128xbf16>, vector<2x128xf32> -> vector<2x128xf32>
    %151 = arith.addf %148, %150 : vector<2x128xf32>
    %152 = vector.extract_strided_slice %145 {offsets = [0, 0], sizes = [2, 128], strides = [1, 1]} : vector<2x256xf32> to vector<2x128xf32>
    %153 = arith.addf %21, %152 : vector<2x128xf32>
    %154 = arith.negf %153 : vector<2x128xf32>
    %155 = math.exp %154 : vector<2x128xf32>
    %cst_37 = arith.constant 1.000000e+00 : f32
    %156 = vector.broadcast %cst_37 : f32 to vector<2x128xf32>
    %157 = arith.addf %156, %155 : vector<2x128xf32>
    %158 = arith.divf %156, %157 : vector<2x128xf32>
    %159 = math.tanh %153 : vector<2x128xf32>
    %160 = vector.extract_strided_slice %158 {offsets = [0, 0], sizes = [2, 32], strides = [1, 1]} : vector<2x128xf32> to vector<2x32xf32>
    %161 = vector.extract_strided_slice %158 {offsets = [0, 32], sizes = [2, 32], strides = [1, 1]} : vector<2x128xf32> to vector<2x32xf32>
    %162 = vector.extract_strided_slice %159 {offsets = [0, 64], sizes = [2, 32], strides = [1, 1]} : vector<2x128xf32> to vector<2x32xf32>
    %163 = vector.extract_strided_slice %158 {offsets = [0, 96], sizes = [2, 32], strides = [1, 1]} : vector<2x128xf32> to vector<2x32xf32>
    %164 = arith.mulf %161, %114 : vector<2x32xf32>
    %165 = arith.mulf %160, %162 : vector<2x32xf32>
    %166 = arith.addf %164, %165 : vector<2x32xf32>
    %167 = math.tanh %166 : vector<2x32xf32>
    %168 = arith.mulf %163, %167 : vector<2x32xf32>
    %169 = arith.negf %151 : vector<2x128xf32>
    %170 = math.exp %169 : vector<2x128xf32>
    %cst_38 = arith.constant 1.000000e+00 : f32
    %171 = vector.broadcast %cst_38 : f32 to vector<2x128xf32>
    %172 = arith.addf %171, %170 : vector<2x128xf32>
    %173 = arith.divf %171, %172 : vector<2x128xf32>
    %174 = math.tanh %151 : vector<2x128xf32>
    %175 = vector.extract_strided_slice %173 {offsets = [0, 0], sizes = [2, 32], strides = [1, 1]} : vector<2x128xf32> to vector<2x32xf32>
    %176 = vector.extract_strided_slice %173 {offsets = [0, 32], sizes = [2, 32], strides = [1, 1]} : vector<2x128xf32> to vector<2x32xf32>
    %177 = vector.extract_strided_slice %174 {offsets = [0, 64], sizes = [2, 32], strides = [1, 1]} : vector<2x128xf32> to vector<2x32xf32>
    %178 = vector.extract_strided_slice %173 {offsets = [0, 96], sizes = [2, 32], strides = [1, 1]} : vector<2x128xf32> to vector<2x32xf32>
    %179 = arith.mulf %176, %129 : vector<2x32xf32>
    %180 = arith.mulf %175, %177 : vector<2x32xf32>
    %181 = arith.addf %179, %180 : vector<2x32xf32>
    %182 = math.tanh %181 : vector<2x32xf32>
    %183 = arith.mulf %178, %182 : vector<2x32xf32>
    %184 = arith.truncf %183 : vector<2x32xf32> to vector<2x32xbf16>
    %cst_39 = arith.constant dense<0.000000e+00> : vector<2x128xf32>
    %185 = tpu.matmul %184, %2, %cst_39 {dimension_numbers = #tpu.dot_dimension_numbers<[1], [0], [0], [1], [0, 0, 1, 1], [], []>} : vector<2x32xbf16>, vector<32x128xbf16>, vector<2x128xf32> -> vector<2x128xf32>
    %186 = vector.broadcast %4 : vector<1x128xf32> to vector<2x128xf32>
    %187 = arith.addf %185, %186 : vector<2x128xf32>
    %188 = arith.negf %187 : vector<2x128xf32>
    %189 = math.exp %188 : vector<2x128xf32>
    %cst_40 = arith.constant 1.000000e+00 : f32
    %190 = vector.broadcast %cst_40 : f32 to vector<2x128xf32>
    %191 = arith.addf %190, %189 : vector<2x128xf32>
    %192 = arith.divf %190, %191 : vector<2x128xf32>
    %c0_41 = arith.constant 0 : index
    %c4 = arith.constant 4 : index
    %c0_42 = arith.constant 0 : index
    %193 = vector.load %arg9[%c0_41, %c4, %c0_42] : memref<1x16x128xf32, #tpu.memory_space<vmem>>, vector<1x2x128xf32>
    %194 = vector.shape_cast %193 : vector<1x2x128xf32> to vector<2x128xf32>
    %195 = vector.shape_cast %192 : vector<2x128xf32> to vector<1x2x128xf32>
    tpu.vector_store %arg9[%c0_41, %c4, %c0_42], %195 {strides = array<i32>} : memref<1x16x128xf32, #tpu.memory_space<vmem>>, vector<1x2x128xf32>,
    %196 = arith.truncf %168 : vector<2x32xf32> to vector<2x32xbf16>
    %cst_43 = arith.constant dense<0.000000e+00> : vector<2x256xf32>
    %197 = tpu.matmul %196, %0, %cst_43 {dimension_numbers = #tpu.dot_dimension_numbers<[1], [0], [0], [1], [0, 0, 1, 1], [], []>} : vector<2x32xbf16>, vector<32x256xbf16>, vector<2x256xf32> -> vector<2x256xf32>
    %198 = vector.extract_strided_slice %197 {offsets = [0, 128], sizes = [2, 128], strides = [1, 1]} : vector<2x256xf32> to vector<2x128xf32>
    %199 = vector.broadcast %3 : vector<1x128xf32> to vector<2x128xf32>
    %200 = arith.addf %198, %199 : vector<2x128xf32>
    %201 = arith.truncf %183 : vector<2x32xf32> to vector<2x32xbf16>
    %cst_44 = arith.constant dense<0.000000e+00> : vector<2x128xf32>
    %202 = tpu.matmul %201, %1, %cst_44 {dimension_numbers = #tpu.dot_dimension_numbers<[1], [0], [0], [1], [0, 0, 1, 1], [], []>} : vector<2x32xbf16>, vector<32x128xbf16>, vector<2x128xf32> -> vector<2x128xf32>
    %203 = arith.addf %200, %202 : vector<2x128xf32>
    %204 = vector.extract_strided_slice %197 {offsets = [0, 0], sizes = [2, 128], strides = [1, 1]} : vector<2x256xf32> to vector<2x128xf32>
    %205 = arith.addf %22, %204 : vector<2x128xf32>
    %206 = arith.negf %205 : vector<2x128xf32>
    %207 = math.exp %206 : vector<2x128xf32>
    %cst_45 = arith.constant 1.000000e+00 : f32
    %208 = vector.broadcast %cst_45 : f32 to vector<2x128xf32>
    %209 = arith.addf %208, %207 : vector<2x128xf32>
    %210 = arith.divf %208, %209 : vector<2x128xf32>
    %211 = math.tanh %205 : vector<2x128xf32>
    %212 = vector.extract_strided_slice %210 {offsets = [0, 0], sizes = [2, 32], strides = [1, 1]} : vector<2x128xf32> to vector<2x32xf32>
    %213 = vector.extract_strided_slice %210 {offsets = [0, 32], sizes = [2, 32], strides = [1, 1]} : vector<2x128xf32> to vector<2x32xf32>
    %214 = vector.extract_strided_slice %211 {offsets = [0, 64], sizes = [2, 32], strides = [1, 1]} : vector<2x128xf32> to vector<2x32xf32>
    %215 = vector.extract_strided_slice %210 {offsets = [0, 96], sizes = [2, 32], strides = [1, 1]} : vector<2x128xf32> to vector<2x32xf32>
    %216 = arith.mulf %213, %166 : vector<2x32xf32>
    %217 = arith.mulf %212, %214 : vector<2x32xf32>
    %218 = arith.addf %216, %217 : vector<2x32xf32>
    %219 = math.tanh %218 : vector<2x32xf32>
    %220 = arith.mulf %215, %219 : vector<2x32xf32>
    %221 = arith.negf %203 : vector<2x128xf32>
    %222 = math.exp %221 : vector<2x128xf32>
    %cst_46 = arith.constant 1.000000e+00 : f32
    %223 = vector.broadcast %cst_46 : f32 to vector<2x128xf32>
    %224 = arith.addf %223, %222 : vector<2x128xf32>
    %225 = arith.divf %223, %224 : vector<2x128xf32>
    %226 = math.tanh %203 : vector<2x128xf32>
    %227 = vector.extract_strided_slice %225 {offsets = [0, 0], sizes = [2, 32], strides = [1, 1]} : vector<2x128xf32> to vector<2x32xf32>
    %228 = vector.extract_strided_slice %225 {offsets = [0, 32], sizes = [2, 32], strides = [1, 1]} : vector<2x128xf32> to vector<2x32xf32>
    %229 = vector.extract_strided_slice %226 {offsets = [0, 64], sizes = [2, 32], strides = [1, 1]} : vector<2x128xf32> to vector<2x32xf32>
    %230 = vector.extract_strided_slice %225 {offsets = [0, 96], sizes = [2, 32], strides = [1, 1]} : vector<2x128xf32> to vector<2x32xf32>
    %231 = arith.mulf %228, %181 : vector<2x32xf32>
    %232 = arith.mulf %227, %229 : vector<2x32xf32>
    %233 = arith.addf %231, %232 : vector<2x32xf32>
    %234 = math.tanh %233 : vector<2x32xf32>
    %235 = arith.mulf %230, %234 : vector<2x32xf32>
    %236 = arith.truncf %235 : vector<2x32xf32> to vector<2x32xbf16>
    %cst_47 = arith.constant dense<0.000000e+00> : vector<2x128xf32>
    %237 = tpu.matmul %236, %2, %cst_47 {dimension_numbers = #tpu.dot_dimension_numbers<[1], [0], [0], [1], [0, 0, 1, 1], [], []>} : vector<2x32xbf16>, vector<32x128xbf16>, vector<2x128xf32> -> vector<2x128xf32>
    %238 = vector.broadcast %4 : vector<1x128xf32> to vector<2x128xf32>
    %239 = arith.addf %237, %238 : vector<2x128xf32>
    %240 = arith.negf %239 : vector<2x128xf32>
    %241 = math.exp %240 : vector<2x128xf32>
    %cst_48 = arith.constant 1.000000e+00 : f32
    %242 = vector.broadcast %cst_48 : f32 to vector<2x128xf32>
    %243 = arith.addf %242, %241 : vector<2x128xf32>
    %244 = arith.divf %242, %243 : vector<2x128xf32>
    %c0_49 = arith.constant 0 : index
    %c6 = arith.constant 6 : index
    %c0_50 = arith.constant 0 : index
    %245 = vector.load %arg9[%c0_49, %c6, %c0_50] : memref<1x16x128xf32, #tpu.memory_space<vmem>>, vector<1x2x128xf32>
    %246 = vector.shape_cast %245 : vector<1x2x128xf32> to vector<2x128xf32>
    %247 = vector.shape_cast %244 : vector<2x128xf32> to vector<1x2x128xf32>
    tpu.vector_store %arg9[%c0_49, %c6, %c0_50], %247 {strides = array<i32>} : memref<1x16x128xf32, #tpu.memory_space<vmem>>, vector<1x2x128xf32>,
    %248 = arith.truncf %220 : vector<2x32xf32> to vector<2x32xbf16>
    %cst_51 = arith.constant dense<0.000000e+00> : vector<2x256xf32>
    %249 = tpu.matmul %248, %0, %cst_51 {dimension_numbers = #tpu.dot_dimension_numbers<[1], [0], [0], [1], [0, 0, 1, 1], [], []>} : vector<2x32xbf16>, vector<32x256xbf16>, vector<2x256xf32> -> vector<2x256xf32>
    %250 = vector.extract_strided_slice %249 {offsets = [0, 128], sizes = [2, 128], strides = [1, 1]} : vector<2x256xf32> to vector<2x128xf32>
    %251 = vector.broadcast %3 : vector<1x128xf32> to vector<2x128xf32>
    %252 = arith.addf %250, %251 : vector<2x128xf32>
    %253 = arith.truncf %235 : vector<2x32xf32> to vector<2x32xbf16>
    %cst_52 = arith.constant dense<0.000000e+00> : vector<2x128xf32>
    %254 = tpu.matmul %253, %1, %cst_52 {dimension_numbers = #tpu.dot_dimension_numbers<[1], [0], [0], [1], [0, 0, 1, 1], [], []>} : vector<2x32xbf16>, vector<32x128xbf16>, vector<2x128xf32> -> vector<2x128xf32>
    %255 = arith.addf %252, %254 : vector<2x128xf32>
    %256 = vector.extract_strided_slice %249 {offsets = [0, 0], sizes = [2, 128], strides = [1, 1]} : vector<2x256xf32> to vector<2x128xf32>
    %257 = arith.addf %23, %256 : vector<2x128xf32>
    %258 = arith.negf %257 : vector<2x128xf32>
    %259 = math.exp %258 : vector<2x128xf32>
    %cst_53 = arith.constant 1.000000e+00 : f32
    %260 = vector.broadcast %cst_53 : f32 to vector<2x128xf32>
    %261 = arith.addf %260, %259 : vector<2x128xf32>
    %262 = arith.divf %260, %261 : vector<2x128xf32>
    %263 = math.tanh %257 : vector<2x128xf32>
    %264 = vector.extract_strided_slice %262 {offsets = [0, 0], sizes = [2, 32], strides = [1, 1]} : vector<2x128xf32> to vector<2x32xf32>
    %265 = vector.extract_strided_slice %262 {offsets = [0, 32], sizes = [2, 32], strides = [1, 1]} : vector<2x128xf32> to vector<2x32xf32>
    %266 = vector.extract_strided_slice %263 {offsets = [0, 64], sizes = [2, 32], strides = [1, 1]} : vector<2x128xf32> to vector<2x32xf32>
    %267 = vector.extract_strided_slice %262 {offsets = [0, 96], sizes = [2, 32], strides = [1, 1]} : vector<2x128xf32> to vector<2x32xf32>
    %268 = arith.mulf %265, %218 : vector<2x32xf32>
    %269 = arith.mulf %264, %266 : vector<2x32xf32>
    %270 = arith.addf %268, %269 : vector<2x32xf32>
    %271 = math.tanh %270 : vector<2x32xf32>
    %272 = arith.mulf %267, %271 : vector<2x32xf32>
    %273 = arith.negf %255 : vector<2x128xf32>
    %274 = math.exp %273 : vector<2x128xf32>
    %cst_54 = arith.constant 1.000000e+00 : f32
    %275 = vector.broadcast %cst_54 : f32 to vector<2x128xf32>
    %276 = arith.addf %275, %274 : vector<2x128xf32>
    %277 = arith.divf %275, %276 : vector<2x128xf32>
    %278 = math.tanh %255 : vector<2x128xf32>
    %279 = vector.extract_strided_slice %277 {offsets = [0, 0], sizes = [2, 32], strides = [1, 1]} : vector<2x128xf32> to vector<2x32xf32>
    %280 = vector.extract_strided_slice %277 {offsets = [0, 32], sizes = [2, 32], strides = [1, 1]} : vector<2x128xf32> to vector<2x32xf32>
    %281 = vector.extract_strided_slice %278 {offsets = [0, 64], sizes = [2, 32], strides = [1, 1]} : vector<2x128xf32> to vector<2x32xf32>
    %282 = vector.extract_strided_slice %277 {offsets = [0, 96], sizes = [2, 32], strides = [1, 1]} : vector<2x128xf32> to vector<2x32xf32>
    %283 = arith.mulf %280, %233 : vector<2x32xf32>
    %284 = arith.mulf %279, %281 : vector<2x32xf32>
    %285 = arith.addf %283, %284 : vector<2x32xf32>
    %286 = math.tanh %285 : vector<2x32xf32>
    %287 = arith.mulf %282, %286 : vector<2x32xf32>
    %288 = arith.truncf %287 : vector<2x32xf32> to vector<2x32xbf16>
    %cst_55 = arith.constant dense<0.000000e+00> : vector<2x128xf32>
    %289 = tpu.matmul %288, %2, %cst_55 {dimension_numbers = #tpu.dot_dimension_numbers<[1], [0], [0], [1], [0, 0, 1, 1], [], []>} : vector<2x32xbf16>, vector<32x128xbf16>, vector<2x128xf32> -> vector<2x128xf32>
    %290 = vector.broadcast %4 : vector<1x128xf32> to vector<2x128xf32>
    %291 = arith.addf %289, %290 : vector<2x128xf32>
    %292 = arith.negf %291 : vector<2x128xf32>
    %293 = math.exp %292 : vector<2x128xf32>
    %cst_56 = arith.constant 1.000000e+00 : f32
    %294 = vector.broadcast %cst_56 : f32 to vector<2x128xf32>
    %295 = arith.addf %294, %293 : vector<2x128xf32>
    %296 = arith.divf %294, %295 : vector<2x128xf32>
    %c0_57 = arith.constant 0 : index
    %c8 = arith.constant 8 : index
    %c0_58 = arith.constant 0 : index
    %297 = vector.load %arg9[%c0_57, %c8, %c0_58] : memref<1x16x128xf32, #tpu.memory_space<vmem>>, vector<1x2x128xf32>
    %298 = vector.shape_cast %297 : vector<1x2x128xf32> to vector<2x128xf32>
    %299 = vector.shape_cast %296 : vector<2x128xf32> to vector<1x2x128xf32>
    tpu.vector_store %arg9[%c0_57, %c8, %c0_58], %299 {strides = array<i32>} : memref<1x16x128xf32, #tpu.memory_space<vmem>>, vector<1x2x128xf32>,
    %300 = arith.truncf %272 : vector<2x32xf32> to vector<2x32xbf16>
    %cst_59 = arith.constant dense<0.000000e+00> : vector<2x256xf32>
    %301 = tpu.matmul %300, %0, %cst_59 {dimension_numbers = #tpu.dot_dimension_numbers<[1], [0], [0], [1], [0, 0, 1, 1], [], []>} : vector<2x32xbf16>, vector<32x256xbf16>, vector<2x256xf32> -> vector<2x256xf32>
    %302 = vector.extract_strided_slice %301 {offsets = [0, 128], sizes = [2, 128], strides = [1, 1]} : vector<2x256xf32> to vector<2x128xf32>
    %303 = vector.broadcast %3 : vector<1x128xf32> to vector<2x128xf32>
    %304 = arith.addf %302, %303 : vector<2x128xf32>
    %305 = arith.truncf %287 : vector<2x32xf32> to vector<2x32xbf16>
    %cst_60 = arith.constant dense<0.000000e+00> : vector<2x128xf32>
    %306 = tpu.matmul %305, %1, %cst_60 {dimension_numbers = #tpu.dot_dimension_numbers<[1], [0], [0], [1], [0, 0, 1, 1], [], []>} : vector<2x32xbf16>, vector<32x128xbf16>, vector<2x128xf32> -> vector<2x128xf32>
    %307 = arith.addf %304, %306 : vector<2x128xf32>
    %308 = vector.extract_strided_slice %301 {offsets = [0, 0], sizes = [2, 128], strides = [1, 1]} : vector<2x256xf32> to vector<2x128xf32>
    %309 = arith.addf %24, %308 : vector<2x128xf32>
    %310 = arith.negf %309 : vector<2x128xf32>
    %311 = math.exp %310 : vector<2x128xf32>
    %cst_61 = arith.constant 1.000000e+00 : f32
    %312 = vector.broadcast %cst_61 : f32 to vector<2x128xf32>
    %313 = arith.addf %312, %311 : vector<2x128xf32>
    %314 = arith.divf %312, %313 : vector<2x128xf32>
    %315 = math.tanh %309 : vector<2x128xf32>
    %316 = vector.extract_strided_slice %314 {offsets = [0, 0], sizes = [2, 32], strides = [1, 1]} : vector<2x128xf32> to vector<2x32xf32>
    %317 = vector.extract_strided_slice %314 {offsets = [0, 32], sizes = [2, 32], strides = [1, 1]} : vector<2x128xf32> to vector<2x32xf32>
    %318 = vector.extract_strided_slice %315 {offsets = [0, 64], sizes = [2, 32], strides = [1, 1]} : vector<2x128xf32> to vector<2x32xf32>
    %319 = vector.extract_strided_slice %314 {offsets = [0, 96], sizes = [2, 32], strides = [1, 1]} : vector<2x128xf32> to vector<2x32xf32>
    %320 = arith.mulf %317, %270 : vector<2x32xf32>
    %321 = arith.mulf %316, %318 : vector<2x32xf32>
    %322 = arith.addf %320, %321 : vector<2x32xf32>
    %323 = math.tanh %322 : vector<2x32xf32>
    %324 = arith.mulf %319, %323 : vector<2x32xf32>
    %325 = arith.negf %307 : vector<2x128xf32>
    %326 = math.exp %325 : vector<2x128xf32>
    %cst_62 = arith.constant 1.000000e+00 : f32
    %327 = vector.broadcast %cst_62 : f32 to vector<2x128xf32>
    %328 = arith.addf %327, %326 : vector<2x128xf32>
    %329 = arith.divf %327, %328 : vector<2x128xf32>
    %330 = math.tanh %307 : vector<2x128xf32>
    %331 = vector.extract_strided_slice %329 {offsets = [0, 0], sizes = [2, 32], strides = [1, 1]} : vector<2x128xf32> to vector<2x32xf32>
    %332 = vector.extract_strided_slice %329 {offsets = [0, 32], sizes = [2, 32], strides = [1, 1]} : vector<2x128xf32> to vector<2x32xf32>
    %333 = vector.extract_strided_slice %330 {offsets = [0, 64], sizes = [2, 32], strides = [1, 1]} : vector<2x128xf32> to vector<2x32xf32>
    %334 = vector.extract_strided_slice %329 {offsets = [0, 96], sizes = [2, 32], strides = [1, 1]} : vector<2x128xf32> to vector<2x32xf32>
    %335 = arith.mulf %332, %285 : vector<2x32xf32>
    %336 = arith.mulf %331, %333 : vector<2x32xf32>
    %337 = arith.addf %335, %336 : vector<2x32xf32>
    %338 = math.tanh %337 : vector<2x32xf32>
    %339 = arith.mulf %334, %338 : vector<2x32xf32>
    %340 = arith.truncf %339 : vector<2x32xf32> to vector<2x32xbf16>
    %cst_63 = arith.constant dense<0.000000e+00> : vector<2x128xf32>
    %341 = tpu.matmul %340, %2, %cst_63 {dimension_numbers = #tpu.dot_dimension_numbers<[1], [0], [0], [1], [0, 0, 1, 1], [], []>} : vector<2x32xbf16>, vector<32x128xbf16>, vector<2x128xf32> -> vector<2x128xf32>
    %342 = vector.broadcast %4 : vector<1x128xf32> to vector<2x128xf32>
    %343 = arith.addf %341, %342 : vector<2x128xf32>
    %344 = arith.negf %343 : vector<2x128xf32>
    %345 = math.exp %344 : vector<2x128xf32>
    %cst_64 = arith.constant 1.000000e+00 : f32
    %346 = vector.broadcast %cst_64 : f32 to vector<2x128xf32>
    %347 = arith.addf %346, %345 : vector<2x128xf32>
    %348 = arith.divf %346, %347 : vector<2x128xf32>
    %c0_65 = arith.constant 0 : index
    %c10 = arith.constant 10 : index
    %c0_66 = arith.constant 0 : index
    %349 = vector.load %arg9[%c0_65, %c10, %c0_66] : memref<1x16x128xf32, #tpu.memory_space<vmem>>, vector<1x2x128xf32>
    %350 = vector.shape_cast %349 : vector<1x2x128xf32> to vector<2x128xf32>
    %351 = vector.shape_cast %348 : vector<2x128xf32> to vector<1x2x128xf32>
    tpu.vector_store %arg9[%c0_65, %c10, %c0_66], %351 {strides = array<i32>} : memref<1x16x128xf32, #tpu.memory_space<vmem>>, vector<1x2x128xf32>,
    %352 = arith.truncf %324 : vector<2x32xf32> to vector<2x32xbf16>
    %cst_67 = arith.constant dense<0.000000e+00> : vector<2x256xf32>
    %353 = tpu.matmul %352, %0, %cst_67 {dimension_numbers = #tpu.dot_dimension_numbers<[1], [0], [0], [1], [0, 0, 1, 1], [], []>} : vector<2x32xbf16>, vector<32x256xbf16>, vector<2x256xf32> -> vector<2x256xf32>
    %354 = vector.extract_strided_slice %353 {offsets = [0, 128], sizes = [2, 128], strides = [1, 1]} : vector<2x256xf32> to vector<2x128xf32>
    %355 = vector.broadcast %3 : vector<1x128xf32> to vector<2x128xf32>
    %356 = arith.addf %354, %355 : vector<2x128xf32>
    %357 = arith.truncf %339 : vector<2x32xf32> to vector<2x32xbf16>
    %cst_68 = arith.constant dense<0.000000e+00> : vector<2x128xf32>
    %358 = tpu.matmul %357, %1, %cst_68 {dimension_numbers = #tpu.dot_dimension_numbers<[1], [0], [0], [1], [0, 0, 1, 1], [], []>} : vector<2x32xbf16>, vector<32x128xbf16>, vector<2x128xf32> -> vector<2x128xf32>
    %359 = arith.addf %356, %358 : vector<2x128xf32>
    %360 = vector.extract_strided_slice %353 {offsets = [0, 0], sizes = [2, 128], strides = [1, 1]} : vector<2x256xf32> to vector<2x128xf32>
    %361 = arith.addf %25, %360 : vector<2x128xf32>
    %362 = arith.negf %361 : vector<2x128xf32>
    %363 = math.exp %362 : vector<2x128xf32>
    %cst_69 = arith.constant 1.000000e+00 : f32
    %364 = vector.broadcast %cst_69 : f32 to vector<2x128xf32>
    %365 = arith.addf %364, %363 : vector<2x128xf32>
    %366 = arith.divf %364, %365 : vector<2x128xf32>
    %367 = math.tanh %361 : vector<2x128xf32>
    %368 = vector.extract_strided_slice %366 {offsets = [0, 0], sizes = [2, 32], strides = [1, 1]} : vector<2x128xf32> to vector<2x32xf32>
    %369 = vector.extract_strided_slice %366 {offsets = [0, 32], sizes = [2, 32], strides = [1, 1]} : vector<2x128xf32> to vector<2x32xf32>
    %370 = vector.extract_strided_slice %367 {offsets = [0, 64], sizes = [2, 32], strides = [1, 1]} : vector<2x128xf32> to vector<2x32xf32>
    %371 = vector.extract_strided_slice %366 {offsets = [0, 96], sizes = [2, 32], strides = [1, 1]} : vector<2x128xf32> to vector<2x32xf32>
    %372 = arith.mulf %369, %322 : vector<2x32xf32>
    %373 = arith.mulf %368, %370 : vector<2x32xf32>
    %374 = arith.addf %372, %373 : vector<2x32xf32>
    %375 = math.tanh %374 : vector<2x32xf32>
    %376 = arith.mulf %371, %375 : vector<2x32xf32>
    %377 = arith.negf %359 : vector<2x128xf32>
    %378 = math.exp %377 : vector<2x128xf32>
    %cst_70 = arith.constant 1.000000e+00 : f32
    %379 = vector.broadcast %cst_70 : f32 to vector<2x128xf32>
    %380 = arith.addf %379, %378 : vector<2x128xf32>
    %381 = arith.divf %379, %380 : vector<2x128xf32>
    %382 = math.tanh %359 : vector<2x128xf32>
    %383 = vector.extract_strided_slice %381 {offsets = [0, 0], sizes = [2, 32], strides = [1, 1]} : vector<2x128xf32> to vector<2x32xf32>
    %384 = vector.extract_strided_slice %381 {offsets = [0, 32], sizes = [2, 32], strides = [1, 1]} : vector<2x128xf32> to vector<2x32xf32>
    %385 = vector.extract_strided_slice %382 {offsets = [0, 64], sizes = [2, 32], strides = [1, 1]} : vector<2x128xf32> to vector<2x32xf32>
    %386 = vector.extract_strided_slice %381 {offsets = [0, 96], sizes = [2, 32], strides = [1, 1]} : vector<2x128xf32> to vector<2x32xf32>
    %387 = arith.mulf %384, %337 : vector<2x32xf32>
    %388 = arith.mulf %383, %385 : vector<2x32xf32>
    %389 = arith.addf %387, %388 : vector<2x32xf32>
    %390 = math.tanh %389 : vector<2x32xf32>
    %391 = arith.mulf %386, %390 : vector<2x32xf32>
    %392 = arith.truncf %391 : vector<2x32xf32> to vector<2x32xbf16>
    %cst_71 = arith.constant dense<0.000000e+00> : vector<2x128xf32>
    %393 = tpu.matmul %392, %2, %cst_71 {dimension_numbers = #tpu.dot_dimension_numbers<[1], [0], [0], [1], [0, 0, 1, 1], [], []>} : vector<2x32xbf16>, vector<32x128xbf16>, vector<2x128xf32> -> vector<2x128xf32>
    %394 = vector.broadcast %4 : vector<1x128xf32> to vector<2x128xf32>
    %395 = arith.addf %393, %394 : vector<2x128xf32>
    %396 = arith.negf %395 : vector<2x128xf32>
    %397 = math.exp %396 : vector<2x128xf32>
    %cst_72 = arith.constant 1.000000e+00 : f32
    %398 = vector.broadcast %cst_72 : f32 to vector<2x128xf32>
    %399 = arith.addf %398, %397 : vector<2x128xf32>
    %400 = arith.divf %398, %399 : vector<2x128xf32>
    %c0_73 = arith.constant 0 : index
    %c12 = arith.constant 12 : index
    %c0_74 = arith.constant 0 : index
    %401 = vector.load %arg9[%c0_73, %c12, %c0_74] : memref<1x16x128xf32, #tpu.memory_space<vmem>>, vector<1x2x128xf32>
    %402 = vector.shape_cast %401 : vector<1x2x128xf32> to vector<2x128xf32>
    %403 = vector.shape_cast %400 : vector<2x128xf32> to vector<1x2x128xf32>
    tpu.vector_store %arg9[%c0_73, %c12, %c0_74], %403 {strides = array<i32>} : memref<1x16x128xf32, #tpu.memory_space<vmem>>, vector<1x2x128xf32>,
    %404 = arith.truncf %376 : vector<2x32xf32> to vector<2x32xbf16>
    %cst_75 = arith.constant dense<0.000000e+00> : vector<2x256xf32>
    %405 = tpu.matmul %404, %0, %cst_75 {dimension_numbers = #tpu.dot_dimension_numbers<[1], [0], [0], [1], [0, 0, 1, 1], [], []>} : vector<2x32xbf16>, vector<32x256xbf16>, vector<2x256xf32> -> vector<2x256xf32>
    %406 = vector.extract_strided_slice %405 {offsets = [0, 128], sizes = [2, 128], strides = [1, 1]} : vector<2x256xf32> to vector<2x128xf32>
    %407 = vector.broadcast %3 : vector<1x128xf32> to vector<2x128xf32>
    %408 = arith.addf %406, %407 : vector<2x128xf32>
    %409 = arith.truncf %391 : vector<2x32xf32> to vector<2x32xbf16>
    %cst_76 = arith.constant dense<0.000000e+00> : vector<2x128xf32>
    %410 = tpu.matmul %409, %1, %cst_76 {dimension_numbers = #tpu.dot_dimension_numbers<[1], [0], [0], [1], [0, 0, 1, 1], [], []>} : vector<2x32xbf16>, vector<32x128xbf16>, vector<2x128xf32> -> vector<2x128xf32>
    %411 = arith.addf %408, %410 : vector<2x128xf32>
    %412 = arith.negf %411 : vector<2x128xf32>
    %413 = math.exp %412 : vector<2x128xf32>
    %cst_77 = arith.constant 1.000000e+00 : f32
    %414 = vector.broadcast %cst_77 : f32 to vector<2x128xf32>
    %415 = arith.addf %414, %413 : vector<2x128xf32>
    %416 = arith.divf %414, %415 : vector<2x128xf32>
    %417 = math.tanh %411 : vector<2x128xf32>
    %418 = vector.extract_strided_slice %416 {offsets = [0, 0], sizes = [2, 32], strides = [1, 1]} : vector<2x128xf32> to vector<2x32xf32>
    %419 = vector.extract_strided_slice %416 {offsets = [0, 32], sizes = [2, 32], strides = [1, 1]} : vector<2x128xf32> to vector<2x32xf32>
    %420 = vector.extract_strided_slice %417 {offsets = [0, 64], sizes = [2, 32], strides = [1, 1]} : vector<2x128xf32> to vector<2x32xf32>
    %421 = vector.extract_strided_slice %416 {offsets = [0, 96], sizes = [2, 32], strides = [1, 1]} : vector<2x128xf32> to vector<2x32xf32>
    %422 = arith.mulf %419, %389 : vector<2x32xf32>
    %423 = arith.mulf %418, %420 : vector<2x32xf32>
    %424 = arith.addf %422, %423 : vector<2x32xf32>
    %425 = math.tanh %424 : vector<2x32xf32>
    %426 = arith.mulf %421, %425 : vector<2x32xf32>
    %427 = arith.truncf %426 : vector<2x32xf32> to vector<2x32xbf16>
    %cst_78 = arith.constant dense<0.000000e+00> : vector<2x128xf32>
    %428 = tpu.matmul %427, %2, %cst_78 {dimension_numbers = #tpu.dot_dimension_numbers<[1], [0], [0], [1], [0, 0, 1, 1], [], []>} : vector<2x32xbf16>, vector<32x128xbf16>, vector<2x128xf32> -> vector<2x128xf32>
    %429 = vector.broadcast %4 : vector<1x128xf32> to vector<2x128xf32>
    %430 = arith.addf %428, %429 : vector<2x128xf32>
    %431 = arith.negf %430 : vector<2x128xf32>
    %432 = math.exp %431 : vector<2x128xf32>
    %cst_79 = arith.constant 1.000000e+00 : f32
    %433 = vector.broadcast %cst_79 : f32 to vector<2x128xf32>
    %434 = arith.addf %433, %432 : vector<2x128xf32>
    %435 = arith.divf %433, %434 : vector<2x128xf32>
    %c0_80 = arith.constant 0 : index
    %c14 = arith.constant 14 : index
    %c0_81 = arith.constant 0 : index
    %436 = vector.load %arg9[%c0_80, %c14, %c0_81] : memref<1x16x128xf32, #tpu.memory_space<vmem>>, vector<1x2x128xf32>
    %437 = vector.shape_cast %436 : vector<1x2x128xf32> to vector<2x128xf32>
    %438 = vector.shape_cast %435 : vector<2x128xf32> to vector<1x2x128xf32>
    tpu.vector_store %arg9[%c0_80, %c14, %c0_81], %438 {strides = array<i32>} : memref<1x16x128xf32, #tpu.memory_space<vmem>>, vector<1x2x128xf32>,
    return
  }
  func.func @transform_0(%arg0: i32) -> (i32, i32, i32) {
    %c0_i32 = arith.constant 0 : i32
    %c0_i32_0 = arith.constant 0 : i32
    %c0_i32_1 = arith.constant 0 : i32
    return %arg0, %c0_i32, %c0_i32_0 : i32, i32, i32
  }
  func.func @transform_1(%arg0: i32) -> (i32, i32) {
    %c0_i32 = arith.constant 0 : i32
    %c0_i32_0 = arith.constant 0 : i32
    %c0_i32_1 = arith.constant 0 : i32
    return %c0_i32, %c0_i32_0 : i32, i32
  }
  func.func @transform_2(%arg0: i32) -> (i32, i32) {
    %c0_i32 = arith.constant 0 : i32
    %c0_i32_0 = arith.constant 0 : i32
    %c0_i32_1 = arith.constant 0 : i32
    return %c0_i32, %c0_i32_0 : i32, i32
  }
  func.func @transform_3(%arg0: i32) -> (i32, i32) {
    %c0_i32 = arith.constant 0 : i32
    %c0_i32_0 = arith.constant 0 : i32
    %c0_i32_1 = arith.constant 0 : i32
    return %c0_i32, %c0_i32_0 : i32, i32
  }
  func.func @transform_4(%arg0: i32) -> (i32, i32) {
    %c0_i32 = arith.constant 0 : i32
    %c0_i32_0 = arith.constant 0 : i32
    %c0_i32_1 = arith.constant 0 : i32
    return %c0_i32, %c0_i32_0 : i32, i32
  }
  func.func @transform_5(%arg0: i32) -> (i32, i32) {
    %c0_i32 = arith.constant 0 : i32
    %c0_i32_0 = arith.constant 0 : i32
    %c0_i32_1 = arith.constant 0 : i32
    return %c0_i32, %c0_i32_0 : i32, i32
  }
  func.func @transform_6(%arg0: i32) -> (i32, i32) {
    %c0_i32 = arith.constant 0 : i32
    %c0_i32_0 = arith.constant 0 : i32
    %c0_i32_1 = arith.constant 0 : i32
    return %c0_i32, %c0_i32_0 : i32, i32
  }
  func.func @transform_7(%arg0: i32) -> (i32, i32) {
    %c0_i32 = arith.constant 0 : i32
    %c0_i32_0 = arith.constant 0 : i32
    %c0_i32_1 = arith.constant 0 : i32
    return %c0_i32, %c0_i32_0 : i32, i32
  }
  func.func @transform_8(%arg0: i32) -> (i32, i32, i32) {
    %c0_i32 = arith.constant 0 : i32
    %c0_i32_0 = arith.constant 0 : i32
    %c0_i32_1 = arith.constant 0 : i32
    return %arg0, %c0_i32, %c0_i32_0 : i32, i32, i32
  }
}

</mosaic_0001>

<llo_original>
// kernel: lstm_head_forward.1
$region0: #{lstm_head_forward.1}
  #allocation0 [shape = 'u32[]', space=smem, size = 0x4, offset = 0x4, fixed_abs, tag = 'smem constant byte address 0x4 - core index']
  #allocation1 [shape = 'u32[144,128]{1,0:T(1,128)}', space=vmem, size = 0x12000, scoped, tag = 'internal scratch']
  %s0 = inlined_call_operand.vmem [shape: s32[1,16,1], index: 0, kind: input, shape index: {}]
  %s1 = inlined_call_operand.vmem [shape: bf16[32,128], index: 1, kind: input, shape index: {}]
  %s2 = inlined_call_operand.vmem [shape: f32[1,128], index: 2, kind: input, shape index: {}]
  %s3 = inlined_call_operand.vmem [shape: bf16[32,256], index: 3, kind: input, shape index: {}]
  %s4 = inlined_call_operand.hbm [shape: bf16[32,128], index: 4, kind: input, shape index: {}]
  %s5 = inlined_call_operand.vmem [shape: f32[1,128], index: 5, kind: input, shape index: {}]
  %s6 = inlined_call_operand.hbm [shape: bf16[32,128], index: 6, kind: input, shape index: {}]
  %s7 = inlined_call_operand.vmem [shape: f32[1,128], index: 7, kind: input, shape index: {}]
  %s8 = inlined_call_operand.vmem [shape: f32[1,16,128], index: 8, kind: output, shape index: {}]
  %s9 = sld [smem:[#allocation0]]
  $region50: #{lstm_head_forward.1} parent=0
    _
  %s11 = ssub.s32 1, %s9
  %s12 = scalar_select 0, %s11, %s9
  $region1: #{lstm_head_forward.1} parent=0
    #allocation2 [shape = 'u8[8192]{0}', space=vmem, size = 0x2000, scoped, tag = 'input window, operand 4, single buffered']
    #allocation3 [shape = 's32[1]{0}', space=sflag, size = 0x4, scoped, tag = 'scoped memory for lstm_head_forward.1']
    #allocation4 [shape = 'u8[8192]{0}', space=vmem, size = 0x2000, scoped, tag = 'input window, operand 6, single buffered']
    #allocation5 [shape = 's32[1]{0}', space=sflag, size = 0x4, scoped, tag = 'scoped memory for lstm_head_forward.1']
    %13 = vsyncpa [#allocation3], 0
    %14 = vsyncpa [#allocation5], 0
    // Predicated region
    $region2: #{lstm_head_forward.1} parent=1 // pred_check
      _
    $region3: #{lstm_head_forward.1} parent=1 // pred_check_branch
      %16 = sbr.rel (0) target = $region5
    $region4: #{lstm_head_forward.1} parent=1 // pred_region
      _
    $region5: #{lstm_head_forward.1} parent=1 // pred_fallthru
      _
    // Predicated region
    $region6: #{lstm_head_forward.1} parent=1 // pred_check
      _
    $region7: #{lstm_head_forward.1} parent=1 // pred_check_branch
      %18 = sbr.rel (0) target = $region9
    $region8: #{lstm_head_forward.1} parent=1 // pred_region
      _
    $region9: #{lstm_head_forward.1} parent=1 // pred_fallthru
      _
    // Predicated region
    $region10: #{lstm_head_forward.1} parent=1 // pred_check
      _
    $region11: #{lstm_head_forward.1} parent=1 // pred_check_branch
      %20 = sbr.rel (0) target = $region13
    $region12: #{lstm_head_forward.1} parent=1 // pred_region
      _
    $region13: #{lstm_head_forward.1} parent=1 // pred_fallthru
      _
    // Predicated region
    $region14: #{lstm_head_forward.1} parent=1 // pred_check
      _
    $region15: #{lstm_head_forward.1} parent=1 // pred_check_branch
      %22 = sbr.rel (0) target = $region17
    $region16: #{lstm_head_forward.1} parent=1 // pred_region
      _
    $region17: #{lstm_head_forward.1} parent=1 // pred_fallthru
      _
    // Predicated region
    $region18: #{lstm_head_forward.1} parent=1 // pred_check
      _
    $region19: #{lstm_head_forward.1} parent=1 // pred_check_branch
      %24 = sbr.rel (0) target = $region21
    $region20: #{lstm_head_forward.1} parent=1 // pred_region
      %s26 = ssub.s32 256, 256
      %27 = vsyncadd [#allocation3], %s26
      %s28 = sshll.u32 [#allocation2], 4
      %s29 = int_to_ptr.vmem [resolvable:$true] %s28
      %34 = dma.hbm_to_vmem [thread:$0]  %s4, 256, %s29, [#allocation3], 64, 64, 4
    $region21: #{lstm_head_forward.1} parent=1 // pred_fallthru
      _
    // Predicated region
    $region22: #{lstm_head_forward.1} parent=1 // pred_check
      _
    $region23: #{lstm_head_forward.1} parent=1 // pred_check_branch
      %36 = sbr.rel (0) target = $region25
    $region24: #{lstm_head_forward.1} parent=1 // pred_region
      _
    $region25: #{lstm_head_forward.1} parent=1 // pred_fallthru
      _
    // Predicated region
    $region26: #{lstm_head_forward.1} parent=1 // pred_check
      _
    $region27: #{lstm_head_forward.1} parent=1 // pred_check_branch
      %38 = sbr.rel (0) target = $region29
    $region28: #{lstm_head_forward.1} parent=1 // pred_region
      %s40 = ssub.s32 256, 256
      %41 = vsyncadd [#allocation5], %s40
      %s42 = sshll.u32 [#allocation4], 4
      %s43 = int_to_ptr.vmem [resolvable:$true] %s42
      %48 = dma.hbm_to_vmem [thread:$0]  %s6, 256, %s43, [#allocation5], 64, 64, 4
    $region29: #{lstm_head_forward.1} parent=1 // pred_fallthru
      _
    // Predicated region
    $region30: #{lstm_head_forward.1} parent=1 // pred_check
      _
    $region31: #{lstm_head_forward.1} parent=1 // pred_check_branch
      %50 = sbr.rel (0) target = $region33
    $region32: #{lstm_head_forward.1} parent=1 // pred_region
      _
    $region33: #{lstm_head_forward.1} parent=1 // pred_fallthru
      _
    // Predicated region
    $region34: #{lstm_head_forward.1} parent=1 // pred_check
      _
    $region35: #{lstm_head_forward.1} parent=1 // pred_check_branch
      %52 = sbr.rel (0) target = $region37
    $region36: #{lstm_head_forward.1} parent=1 // pred_region
      %53 = dma.done [#allocation3], 256
    $region37: #{lstm_head_forward.1} parent=1 // pred_fallthru
      _
    // Predicated region
    $region38: #{lstm_head_forward.1} parent=1 // pred_check
      _
    $region39: #{lstm_head_forward.1} parent=1 // pred_check_branch
      %55 = sbr.rel (0) target = $region41
    $region40: #{lstm_head_forward.1} parent=1 // pred_region
      %56 = dma.done [#allocation5], 256
    $region41: #{lstm_head_forward.1} parent=1 // pred_fallthru
      _
    %v58 = vld [vmem:[%s3] sm:$0xff]
    %v59 = vld [vmem:[%s3 + $0x8] sm:$0xff]
    %v60 = vld [vmem:[%s3 + $0x10] sm:$0xff]
    %v61 = vld [vmem:[%s3 + $0x18] sm:$0xff]
    %v62 = vld [vmem:[#allocation2] sm:$0xf]
    %v63 = vld [vmem:[#allocation2 + $0x4] sm:$0xf]
    %v64 = vld [vmem:[#allocation2 + $0x8] sm:$0xf]
    %v65 = vld [vmem:[#allocation2 + $0xc] sm:$0xf]
    %v66 = vld [vmem:[#allocation4] sm:$0xf]
    %v67 = vld [vmem:[#allocation4 + $0x4] sm:$0xf]
    %v68 = vld [vmem:[#allocation4 + $0x8] sm:$0xf]
    %v69 = vld [vmem:[#allocation4 + $0xc] sm:$0xf]
    %v70 = vld [vmem:[%s5] sm:$0x1]
    %v71 = vld [vmem:[%s7] sm:$0x1]
    %v72 = vld [vmem:[%s0] sm:$0xff]
    %v73 = vld [vmem:[%s0 + $0x8] sm:$0xff]
    %v74 = vlaneseq
    %v75 = vand.u32 %v74, 127
    %76 = vset.pattern.permute.xlu0 0
    %77 = vperm.xlu0 %76, %v72
    %v78 = vpop.permute.xlu0 %77
    %79 = vset.pattern.permute.xlu0 0
    %80 = vperm.xlu0 %79, %v73
    %v81 = vpop.permute.xlu0 %80
    %vm82 = vcmp.eq.s32.totalorder %v75, %v78
    %vm83 = vcmp.eq.s32.totalorder %v75, %v81
    %v84 = vsel %vm82, 1, 0
    %v85 = vsel %vm83, 1, 0
    %v86 = vcvt.s32.f32 %v84
    %v87 = vcvt.s32.f32 %v85
    %v88 = vpack.c.bf16 %v87, %v86
    %v89 = vld [vmem:[%s1] sm:$0xf]
    %v90 = vld [vmem:[%s1 + $0x4] sm:$0xf]
    %v91 = vld [vmem:[%s1 + $0x8] sm:$0xf]
    %v92 = vld [vmem:[%s1 + $0xc] sm:$0xf]
    %v93 = vld [vmem:[%s2] sm:$0x1]
    %v95 = vlaneseq
    %v96 = vshrl.u32 %v95, 7
    %v97 = vsub.s32 0, %v96
    %v98 = vrot.slane %v93, %v97
    %v104 = vunpack.c.l.b16 %v89
    %v105 = vunpack.c.l.b16 %v90
    %v106 = vunpack.c.l.b16 %v91
    %v107 = vunpack.c.l.b16 %v92
    %v108 = vpack.c.b16 %v105, %v104
    %v109 = vpack.c.b16 %v107, %v106
    %vm112 = vcmask 261120
    %v114 = vsel %vm112, %v88, 0
    %116 = vmatprep.subr.bf16.mxu0 0
    %117 = vmatpush1.bf16.msra.mxu0 %v108
    %118 = vmatprep.subr.bf16.mxu0 0
    %119 = vmatpush1.bf16.msra.mxu0 %v109
    %120 = vmatprep.subr.bf16.mxu0 0
    %121 = vmatpush1.bf16.msra.mxu0 0
    %122 = vmatprep.subr.bf16.mxu0 0
    %123 = vmatpush1.bf16.msra.mxu0 0
    %124 = vmatprep.subr.bf16.mxu0 0
    %125 = vmatpush1.bf16.msra.mxu0 0
    %126 = vmatprep.subr.bf16.mxu0 0
    %127 = vmatpush1.bf16.msra.mxu0 0
    %128 = vmatprep.subr.bf16.mxu0 0
    %129 = vmatpush1.bf16.msra.mxu0 0
    %130 = vmatprep.subr.bf16.mxu0 0
    %131 = vmatpush1.bf16.msra.mxu0 0
    %132 = vmatprep.subr.bf16.mxu0 0
    %133 = vmatpush1.bf16.msra.mxu0 0
    %134 = vmatprep.subr.bf16.mxu0 0
    %135 = vmatpush1.bf16.msra.mxu0 0
    %136 = vmatprep.subr.bf16.mxu0 0
    %137 = vmatpush1.bf16.msra.mxu0 0
    %138 = vmatprep.subr.bf16.mxu0 0
    %139 = vmatpush1.bf16.msra.mxu0 0
    %140 = vmatprep.subr.bf16.mxu0 0
    %141 = vmatpush1.bf16.msra.mxu0 0
    %142 = vmatprep.subr.bf16.mxu0 0
    %143 = vmatpush1.bf16.msra.mxu0 0
    %144 = vmatprep.subr.bf16.mxu0 0
    %145 = vmatpush1.bf16.msra.mxu0 0
    %146 = vmatprep.subr.bf16.mxu0 0
    %147 = vmatpush1.bf16.msra.mxu0 0
    %148 = vmatprep.mubr.bf16.mxu0 0
    %149 = vmatmul.mubr.bf16.gmra.mrb[0].mxu0 %v114
    %v150 = vpop.f32.mrb[0].mxu0
    %v151 = vadd.f32 %v98, %v150
    %v152 = vpop.f32.mrb[0].mxu0
    %v153 = vpop.f32.mrb[0].mxu0
    %v154 = vadd.f32 %v98, %v153
    %v155 = vpop.f32.mrb[0].mxu0
    %156 = vdwg.mxu0
    %v157 = vxor.u32 %v151, 2147483648
    %v158 = vmul.f32 %v157, 1.442695
    %v159 = vpow.pop %v158
    %v160 = vadd.f32 %v159, 1.0
    %v161 = vrcp.pop %v160
    %v162 = vmul.f32 1.0, %v161
    %v163 = vtanh.pop %v151
    %v164 = vmul.f32 %v162, 0.0
    %166 = vrot.lane.b32.xlu0 %v163, 64
    %v167 = vpop.permute.xlu0 %166
    %v169 = vmul.f32 %v162, %v167
    %171 = vrot.lane.b32.xlu0 %v169, 32
    %v172 = vpop.permute.xlu0 %171
    %v174 = vadd.f32 %v164, %v172
    %v175 = vtanh.pop %v174
    %177 = vrot.lane.b32.xlu0 %v175, 64
    %v178 = vpop.permute.xlu0 %177
    %v180 = vmul.f32 %v162, %v178
    %v181 = vpack.c.bf16 %v180, %v180
    %183 = vrot.lane.b32.xlu0 %v181, 32
    %v184 = vpop.permute.xlu0 %183
    %v189 = vunpack.c.l.b16 %v58
    %v190 = vunpack.c.h.b16 %v58
    %v191 = vunpack.c.l.b16 %v59
    %v192 = vunpack.c.h.b16 %v59
    %v193 = vunpack.c.l.b16 %v60
    %v194 = vunpack.c.h.b16 %v60
    %v195 = vunpack.c.l.b16 %v61
    %v196 = vunpack.c.h.b16 %v61
    %v197 = vpack.c.b16 %v191, %v189
    %v198 = vpack.c.b16 %v192, %v190
    %v199 = vpack.c.b16 %v195, %v193
    %v200 = vpack.c.b16 %v196, %v194
    %v206 = vsel %vm112, %v184, 0
    %208 = vmatprep.subr.bf16.mxu0 %v198
    %209 = vmatpush1.bf16.msra.mxu0 %v197
    %210 = vmatprep.subr.bf16.mxu0 %v200
    %211 = vmatpush1.bf16.msra.mxu0 %v199
    %212 = vmatprep.subr.bf16.mxu0 0
    %213 = vmatpush1.bf16.msra.mxu0 0
    %214 = vmatprep.subr.bf16.mxu0 0
    %215 = vmatpush1.bf16.msra.mxu0 0
    %216 = vmatprep.subr.bf16.mxu0 0
    %217 = vmatpush1.bf16.msra.mxu0 0
    %218 = vmatprep.subr.bf16.mxu0 0
    %219 = vmatpush1.bf16.msra.mxu0 0
    %220 = vmatprep.subr.bf16.mxu0 0
    %221 = vmatpush1.bf16.msra.mxu0 0
    %222 = vmatprep.subr.bf16.mxu0 0
    %223 = vmatpush1.bf16.msra.mxu0 0
    %224 = vmatprep.subr.bf16.mxu0 0
    %225 = vmatpush1.bf16.msra.mxu0 0
    %226 = vmatprep.subr.bf16.mxu0 0
    %227 = vmatpush1.bf16.msra.mxu0 0
    %228 = vmatprep.subr.bf16.mxu0 0
    %229 = vmatpush1.bf16.msra.mxu0 0
    %230 = vmatprep.subr.bf16.mxu0 0
    %231 = vmatpush1.bf16.msra.mxu0 0
    %232 = vmatprep.subr.bf16.mxu0 0
    %233 = vmatpush1.bf16.msra.mxu0 0
    %234 = vmatprep.subr.bf16.mxu0 0
    %235 = vmatpush1.bf16.msra.mxu0 0
    %236 = vmatprep.subr.bf16.mxu0 0
    %237 = vmatpush1.bf16.msra.mxu0 0
    %238 = vmatprep.subr.bf16.mxu0 0
    %239 = vmatpush1.bf16.msra.mxu0 0
    %240 = vmatprep.mubr.bf16.mxu0 0
    %241 = vmatmul.mubr.bf16.gmra.mrb[0].mxu0 %v206
    %v242 = vpop.f32.mrb[0].mxu0
    %v243 = vadd.f32 0.0, %v242
    %v244 = vpop.f32.mrb[0].mxu0
    %v245 = vadd.f32 0.0, %v244
    %v246 = vpop.f32.mrb[0].mxu0
    %v247 = vpop.f32.mrb[0].mxu0
    %248 = vdwg.mxu0
    %v250 = vlaneseq
    %v251 = vshrl.u32 %v250, 7
    %v252 = vsub.s32 0, %v251
    %v253 = vrot.slane %v70, %v252
    %v255 = vadd.f32 %v245, %v253
    %v257 = vrot.slane %v243, 6
    %v259 = vadd.f32 %v151, %v257
    %v260 = vxor.u32 %v259, 2147483648
    %v261 = vmul.f32 %v260, 1.442695
    %v262 = vpow.pop %v261
    %v263 = vadd.f32 %v262, 1.0
    %v264 = vrcp.pop %v263
    %v265 = vmul.f32 1.0, %v264
    %v266 = vtanh.pop %v259
    %v268 = vrot.slane %v174, 6
    %v270 = vmul.f32 %v265, %v268
    %272 = vrot.lane.b32.xlu0 %v266, 64
    %v273 = vpop.permute.xlu0 %272
    %v275 = vmul.f32 %v265, %v273
    %277 = vrot.lane.b32.xlu0 %v275, 32
    %v278 = vpop.permute.xlu0 %277
    %v280 = vadd.f32 %v270, %v278
    %v281 = vtanh.pop %v280
    %283 = vrot.lane.b32.xlu0 %v281, 64
    %v284 = vpop.permute.xlu0 %283
    %v286 = vmul.f32 %v265, %v284
    %v287 = vxor.u32 %v255, 2147483648
    %v288 = vmul.f32 %v287, 1.442695
    %v289 = vpow.pop %v288
    %v290 = vadd.f32 %v289, 1.0
    %v291 = vrcp.pop %v290
    %v292 = vmul.f32 1.0, %v291
    %v293 = vtanh.pop %v255
    %v294 = vmul.f32 %v292, 0.0
    %296 = vrot.lane.b32.xlu0 %v293, 64
    %v297 = vpop.permute.xlu0 %296
    %v299 = vmul.f32 %v292, %v297
    %301 = vrot.lane.b32.xlu0 %v299, 32
    %v302 = vpop.permute.xlu0 %301
    %v304 = vadd.f32 %v294, %v302
    %v305 = vtanh.pop %v304
    %307 = vrot.lane.b32.xlu0 %v305, 64
    %v308 = vpop.permute.xlu0 %307
    %v310 = vmul.f32 %v292, %v308
    %v311 = vpack.c.bf16 %v310, %v310
    %v313 = vlaneseq
    %v314 = vshrl.u32 %v313, 7
    %v315 = vsub.s32 0, %v314
    %v316 = vrot.slane %v71, %v315
    %319 = vrot.lane.b32.xlu0 %v311, 32
    %v320 = vpop.permute.xlu0 %319
    %v325 = vunpack.c.l.b16 %v66
    %v326 = vunpack.c.l.b16 %v67
    %v327 = vunpack.c.l.b16 %v68
    %v328 = vunpack.c.l.b16 %v69
    %v329 = vpack.c.b16 %v326, %v325
    %v330 = vpack.c.b16 %v328, %v327
    %v334 = vsel %vm112, %v320, 0
    %336 = vmatprep.subr.bf16.mxu0 0
    %337 = vmatpush1.bf16.msra.mxu0 %v329
    %338 = vmatprep.subr.bf16.mxu0 0
    %339 = vmatpush1.bf16.msra.mxu0 %v330
    %340 = vmatprep.subr.bf16.mxu0 0
    %341 = vmatpush1.bf16.msra.mxu0 0
    %342 = vmatprep.subr.bf16.mxu0 0
    %343 = vmatpush1.bf16.msra.mxu0 0
    %344 = vmatprep.subr.bf16.mxu0 0
    %345 = vmatpush1.bf16.msra.mxu0 0
    %346 = vmatprep.subr.bf16.mxu0 0
    %347 = vmatpush1.bf16.msra.mxu0 0
    %348 = vmatprep.subr.bf16.mxu0 0
    %349 = vmatpush1.bf16.msra.mxu0 0
    %350 = vmatprep.subr.bf16.mxu0 0
    %351 = vmatpush1.bf16.msra.mxu0 0
    %352 = vmatprep.subr.bf16.mxu0 0
    %353 = vmatpush1.bf16.msra.mxu0 0
    %354 = vmatprep.subr.bf16.mxu0 0
    %355 = vmatpush1.bf16.msra.mxu0 0
    %356 = vmatprep.subr.bf16.mxu0 0
    %357 = vmatpush1.bf16.msra.mxu0 0
    %358 = vmatprep.subr.bf16.mxu0 0
    %359 = vmatpush1.bf16.msra.mxu0 0
    %360 = vmatprep.subr.bf16.mxu0 0
    %361 = vmatpush1.bf16.msra.mxu0 0
    %362 = vmatprep.subr.bf16.mxu0 0
    %363 = vmatpush1.bf16.msra.mxu0 0
    %364 = vmatprep.subr.bf16.mxu0 0
    %365 = vmatpush1.bf16.msra.mxu0 0
    %366 = vmatprep.subr.bf16.mxu0 0
    %367 = vmatpush1.bf16.msra.mxu0 0
    %368 = vmatprep.mubr.bf16.mxu0 0
    %369 = vmatmul.mubr.bf16.gmra.mrb[0].mxu0 %v334
    %v370 = vpop.f32.mrb[0].mxu0
    %v371 = vadd.f32 %v316, %v370
    %v372 = vpop.f32.mrb[0].mxu0
    %v373 = vpop.f32.mrb[0].mxu0
    %v374 = vpop.f32.mrb[0].mxu0
    %375 = vdwg.mxu0
    %v376 = vxor.u32 %v371, 2147483648
    %v377 = vmul.f32 %v376, 1.442695
    %v378 = vpow.pop %v377
    %v379 = vadd.f32 %v378, 1.0
    %v380 = vrcp.pop %v379
    %v381 = vmul.f32 1.0, %v380
    %382 = vst [vmem:[%s8] sm:$0x3] %v381
    %v383 = vpack.c.bf16 %v286, %v286
    %v385 = vrot.slane %v383, 1
    %386 = vrot.lane.b32.xlu0 %v385, 32
    %v387 = vpop.permute.xlu0 %386
    %v389 = vsel %vm112, %v387, 0
    %391 = vmatprep.subr.bf16.mxu0 %v198
    %392 = vmatpush1.bf16.msra.mxu0 %v197
    %393 = vmatprep.subr.bf16.mxu0 %v200
    %394 = vmatpush1.bf16.msra.mxu0 %v199
    %395 = vmatprep.subr.bf16.mxu0 0
    %396 = vmatpush1.bf16.msra.mxu0 0
    %397 = vmatprep.subr.bf16.mxu0 0
    %398 = vmatpush1.bf16.msra.mxu0 0
    %399 = vmatprep.subr.bf16.mxu0 0
    %400 = vmatpush1.bf16.msra.mxu0 0
    %401 = vmatprep.subr.bf16.mxu0 0
    %402 = vmatpush1.bf16.msra.mxu0 0
    %403 = vmatprep.subr.bf16.mxu0 0
    %404 = vmatpush1.bf16.msra.mxu0 0
    %405 = vmatprep.subr.bf16.mxu0 0
    %406 = vmatpush1.bf16.msra.mxu0 0
    %407 = vmatprep.subr.bf16.mxu0 0
    %408 = vmatpush1.bf16.msra.mxu0 0
    %409 = vmatprep.subr.bf16.mxu0 0
    %410 = vmatpush1.bf16.msra.mxu0 0
    %411 = vmatprep.subr.bf16.mxu0 0
    %412 = vmatpush1.bf16.msra.mxu0 0
    %413 = vmatprep.subr.bf16.mxu0 0
    %414 = vmatpush1.bf16.msra.mxu0 0
    %415 = vmatprep.subr.bf16.mxu0 0
    %416 = vmatpush1.bf16.msra.mxu0 0
    %417 = vmatprep.subr.bf16.mxu0 0
    %418 = vmatpush1.bf16.msra.mxu0 0
    %419 = vmatprep.subr.bf16.mxu0 0
    %420 = vmatpush1.bf16.msra.mxu0 0
    %421 = vmatprep.subr.bf16.mxu0 0
    %422 = vmatpush1.bf16.msra.mxu0 0
    %423 = vmatprep.mubr.bf16.mxu0 0
    %424 = vmatmul.mubr.bf16.gmra.mrb[0].mxu0 %v389
    %v425 = vpop.f32.mrb[0].mxu0
    %v426 = vadd.f32 0.0, %v425
    %v427 = vpop.f32.mrb[0].mxu0
    %v428 = vadd.f32 0.0, %v427
    %v429 = vpop.f32.mrb[0].mxu0
    %v430 = vpop.f32.mrb[0].mxu0
    %431 = vdwg.mxu0
    %v432 = vadd.f32 %v428, %v253
    %v437 = vunpack.c.l.b16 %v62
    %v438 = vunpack.c.l.b16 %v63
    %v439 = vunpack.c.l.b16 %v64
    %v440 = vunpack.c.l.b16 %v65
    %v441 = vpack.c.b16 %v438, %v437
    %v442 = vpack.c.b16 %v440, %v439
    %445 = vmatprep.subr.bf16.mxu0 0
    %446 = vmatpush1.bf16.msra.mxu0 %v441
    %447 = vmatprep.subr.bf16.mxu0 0
    %448 = vmatpush1.bf16.msra.mxu0 %v442
    %449 = vmatprep.subr.bf16.mxu0 0
    %450 = vmatpush1.bf16.msra.mxu0 0
    %451 = vmatprep.subr.bf16.mxu0 0
    %452 = vmatpush1.bf16.msra.mxu0 0
    %453 = vmatprep.subr.bf16.mxu0 0
    %454 = vmatpush1.bf16.msra.mxu0 0
    %455 = vmatprep.subr.bf16.mxu0 0
    %456 = vmatpush1.bf16.msra.mxu0 0
    %457 = vmatprep.subr.bf16.mxu0 0
    %458 = vmatpush1.bf16.msra.mxu0 0
    %459 = vmatprep.subr.bf16.mxu0 0
    %460 = vmatpush1.bf16.msra.mxu0 0
    %461 = vmatprep.subr.bf16.mxu0 0
    %462 = vmatpush1.bf16.msra.mxu0 0
    %463 = vmatprep.subr.bf16.mxu0 0
    %464 = vmatpush1.bf16.msra.mxu0 0
    %465 = vmatprep.subr.bf16.mxu0 0
    %466 = vmatpush1.bf16.msra.mxu0 0
    %467 = vmatprep.subr.bf16.mxu0 0
    %468 = vmatpush1.bf16.msra.mxu0 0
    %469 = vmatprep.subr.bf16.mxu0 0
    %470 = vmatpush1.bf16.msra.mxu0 0
    %471 = vmatprep.subr.bf16.mxu0 0
    %472 = vmatpush1.bf16.msra.mxu0 0
    %473 = vmatprep.subr.bf16.mxu0 0
    %474 = vmatpush1.bf16.msra.mxu0 0
    %475 = vmatprep.subr.bf16.mxu0 0
    %476 = vmatpush1.bf16.msra.mxu0 0
    %477 = vmatprep.mubr.bf16.mxu0 0
    %478 = vmatmul.mubr.bf16.gmra.mrb[0].mxu0 %v334
    %v479 = vpop.f32.mrb[0].mxu0
    %v480 = vadd.f32 0.0, %v479
    %v481 = vpop.f32.mrb[0].mxu0
    %v482 = vpop.f32.mrb[0].mxu0
    %v483 = vpop.f32.mrb[0].mxu0
    %484 = vdwg.mxu0
    %v485 = vadd.f32 %v432, %v480
    %v487 = vrot.slane %v426, 4
    %v489 = vadd.f32 %v151, %v487
    %v490 = vxor.u32 %v489, 2147483648
    %v491 = vmul.f32 %v490, 1.442695
    %v492 = vpow.pop %v491
    %v493 = vadd.f32 %v492, 1.0
    %v494 = vrcp.pop %v493
    %v495 = vmul.f32 1.0, %v494
    %v496 = vtanh.pop %v489
    %v498 = vrot.slane %v280, 6
    %v500 = vmul.f32 %v495, %v498
    %502 = vrot.lane.b32.xlu0 %v496, 64
    %v503 = vpop.permute.xlu0 %502
    %v505 = vmul.f32 %v495, %v503
    %507 = vrot.lane.b32.xlu0 %v505, 32
    %v508 = vpop.permute.xlu0 %507
    %v510 = vadd.f32 %v500, %v508
    %v511 = vtanh.pop %v510
    %513 = vrot.lane.b32.xlu0 %v511, 64
    %v514 = vpop.permute.xlu0 %513
    %v516 = vmul.f32 %v495, %v514
    %v517 = vxor.u32 %v485, 2147483648
    %v518 = vmul.f32 %v517, 1.442695
    %v519 = vpow.pop %v518
    %v520 = vadd.f32 %v519, 1.0
    %v521 = vrcp.pop %v520
    %v522 = vmul.f32 1.0, %v521
    %v523 = vtanh.pop %v485
    %v524 = vmul.f32 %v522, %v304
    %526 = vrot.lane.b32.xlu0 %v523, 64
    %v527 = vpop.permute.xlu0 %526
    %v529 = vmul.f32 %v522, %v527
    %531 = vrot.lane.b32.xlu0 %v529, 32
    %v532 = vpop.permute.xlu0 %531
    %v534 = vadd.f32 %v524, %v532
    %v535 = vtanh.pop %v534
    %537 = vrot.lane.b32.xlu0 %v535, 64
    %v538 = vpop.permute.xlu0 %537
    %v540 = vmul.f32 %v522, %v538
    %v541 = vpack.c.bf16 %v540, %v540
    %543 = vrot.lane.b32.xlu0 %v541, 32
    %v544 = vpop.permute.xlu0 %543
    %v546 = vsel %vm112, %v544, 0
    %548 = vmatprep.subr.bf16.mxu0 0
    %549 = vmatpush1.bf16.msra.mxu0 %v329
    %550 = vmatprep.subr.bf16.mxu0 0
    %551 = vmatpush1.bf16.msra.mxu0 %v330
    %552 = vmatprep.subr.bf16.mxu0 0
    %553 = vmatpush1.bf16.msra.mxu0 0
    %554 = vmatprep.subr.bf16.mxu0 0
    %555 = vmatpush1.bf16.msra.mxu0 0
    %556 = vmatprep.subr.bf16.mxu0 0
    %557 = vmatpush1.bf16.msra.mxu0 0
    %558 = vmatprep.subr.bf16.mxu0 0
    %559 = vmatpush1.bf16.msra.mxu0 0
    %560 = vmatprep.subr.bf16.mxu0 0
    %561 = vmatpush1.bf16.msra.mxu0 0
    %562 = vmatprep.subr.bf16.mxu0 0
    %563 = vmatpush1.bf16.msra.mxu0 0
    %564 = vmatprep.subr.bf16.mxu0 0
    %565 = vmatpush1.bf16.msra.mxu0 0
    %566 = vmatprep.subr.bf16.mxu0 0
    %567 = vmatpush1.bf16.msra.mxu0 0
    %568 = vmatprep.subr.bf16.mxu0 0
    %569 = vmatpush1.bf16.msra.mxu0 0
    %570 = vmatprep.subr.bf16.mxu0 0
    %571 = vmatpush1.bf16.msra.mxu0 0
    %572 = vmatprep.subr.bf16.mxu0 0
    %573 = vmatpush1.bf16.msra.mxu0 0
    %574 = vmatprep.subr.bf16.mxu0 0
    %575 = vmatpush1.bf16.msra.mxu0 0
    %576 = vmatprep.subr.bf16.mxu0 0
    %577 = vmatpush1.bf16.msra.mxu0 0
    %578 = vmatprep.subr.bf16.mxu0 0
    %579 = vmatpush1.bf16.msra.mxu0 0
    %580 = vmatprep.mubr.bf16.mxu0 0
    %581 = vmatmul.mubr.bf16.gmra.mrb[0].mxu0 %v546
    %v582 = vpop.f32.mrb[0].mxu0
    %v583 = vadd.f32 %v316, %v582
    %v584 = vpop.f32.mrb[0].mxu0
    %v585 = vpop.f32.mrb[0].mxu0
    %v586 = vpop.f32.mrb[0].mxu0
    %587 = vdwg.mxu0
    %v588 = vxor.u32 %v583, 2147483648
    %v589 = vmul.f32 %v588, 1.442695
    %v590 = vpow.pop %v589
    %v591 = vadd.f32 %v590, 1.0
    %v592 = vrcp.pop %v591
    %v593 = vmul.f32 1.0, %v592
    %594 = vst [vmem:[%s8 + $0x2] sm:$0x3] %v593
    %v595 = vpack.c.bf16 %v516, %v516
    %v597 = vrot.slane %v595, 2
    %598 = vrot.lane.b32.xlu0 %v597, 32
    %v599 = vpop.permute.xlu0 %598
    %v601 = vsel %vm112, %v599, 0
    %603 = vmatprep.subr.bf16.mxu0 %v198
    %604 = vmatpush1.bf16.msra.mxu0 %v197
    %605 = vmatprep.subr.bf16.mxu0 %v200
    %606 = vmatpush1.bf16.msra.mxu0 %v199
    %607 = vmatprep.subr.bf16.mxu0 0
    %608 = vmatpush1.bf16.msra.mxu0 0
    %609 = vmatprep.subr.bf16.mxu0 0
    %610 = vmatpush1.bf16.msra.mxu0 0
    %611 = vmatprep.subr.bf16.mxu0 0
    %612 = vmatpush1.bf16.msra.mxu0 0
    %613 = vmatprep.subr.bf16.mxu0 0
    %614 = vmatpush1.bf16.msra.mxu0 0
    %615 = vmatprep.subr.bf16.mxu0 0
    %616 = vmatpush1.bf16.msra.mxu0 0
    %617 = vmatprep.subr.bf16.mxu0 0
    %618 = vmatpush1.bf16.msra.mxu0 0
    %619 = vmatprep.subr.bf16.mxu0 0
    %620 = vmatpush1.bf16.msra.mxu0 0
    %621 = vmatprep.subr.bf16.mxu0 0
    %622 = vmatpush1.bf16.msra.mxu0 0
    %623 = vmatprep.subr.bf16.mxu0 0
    %624 = vmatpush1.bf16.msra.mxu0 0
    %625 = vmatprep.subr.bf16.mxu0 0
    %626 = vmatpush1.bf16.msra.mxu0 0
    %627 = vmatprep.subr.bf16.mxu0 0
    %628 = vmatpush1.bf16.msra.mxu0 0
    %629 = vmatprep.subr.bf16.mxu0 0
    %630 = vmatpush1.bf16.msra.mxu0 0
    %631 = vmatprep.subr.bf16.mxu0 0
    %632 = vmatpush1.bf16.msra.mxu0 0
    %633 = vmatprep.subr.bf16.mxu0 0
    %634 = vmatpush1.bf16.msra.mxu0 0
    %635 = vmatprep.mubr.bf16.mxu0 0
    %636 = vmatmul.mubr.bf16.gmra.mrb[0].mxu0 %v601
    %v637 = vpop.f32.mrb[0].mxu0
    %v638 = vadd.f32 0.0, %v637
    %v639 = vpop.f32.mrb[0].mxu0
    %v640 = vadd.f32 0.0, %v639
    %v641 = vpop.f32.mrb[0].mxu0
    %v642 = vpop.f32.mrb[0].mxu0
    %643 = vdwg.mxu0
    %v644 = vadd.f32 %v640, %v253
    %645 = vmatprep.subr.bf16.mxu0 0
    %646 = vmatpush1.bf16.msra.mxu0 %v441
    %647 = vmatprep.subr.bf16.mxu0 0
    %648 = vmatpush1.bf16.msra.mxu0 %v442
    %649 = vmatprep.subr.bf16.mxu0 0
    %650 = vmatpush1.bf16.msra.mxu0 0
    %651 = vmatprep.subr.bf16.mxu0 0
    %652 = vmatpush1.bf16.msra.mxu0 0
    %653 = vmatprep.subr.bf16.mxu0 0
    %654 = vmatpush1.bf16.msra.mxu0 0
    %655 = vmatprep.subr.bf16.mxu0 0
    %656 = vmatpush1.bf16.msra.mxu0 0
    %657 = vmatprep.subr.bf16.mxu0 0
    %658 = vmatpush1.bf16.msra.mxu0 0
    %659 = vmatprep.subr.bf16.mxu0 0
    %660 = vmatpush1.bf16.msra.mxu0 0
    %661 = vmatprep.subr.bf16.mxu0 0
    %662 = vmatpush1.bf16.msra.mxu0 0
    %663 = vmatprep.subr.bf16.mxu0 0
    %664 = vmatpush1.bf16.msra.mxu0 0
    %665 = vmatprep.subr.bf16.mxu0 0
    %666 = vmatpush1.bf16.msra.mxu0 0
    %667 = vmatprep.subr.bf16.mxu0 0
    %668 = vmatpush1.bf16.msra.mxu0 0
    %669 = vmatprep.subr.bf16.mxu0 0
    %670 = vmatpush1.bf16.msra.mxu0 0
    %671 = vmatprep.subr.bf16.mxu0 0
    %672 = vmatpush1.bf16.msra.mxu0 0
    %673 = vmatprep.subr.bf16.mxu0 0
    %674 = vmatpush1.bf16.msra.mxu0 0
    %675 = vmatprep.subr.bf16.mxu0 0
    %676 = vmatpush1.bf16.msra.mxu0 0
    %677 = vmatprep.mubr.bf16.mxu0 0
    %678 = vmatmul.mubr.bf16.gmra.mrb[0].mxu0 %v546
    %v679 = vpop.f32.mrb[0].mxu0
    %v680 = vadd.f32 0.0, %v679
    %v681 = vpop.f32.mrb[0].mxu0
    %v682 = vpop.f32.mrb[0].mxu0
    %v683 = vpop.f32.mrb[0].mxu0
    %684 = vdwg.mxu0
    %v685 = vadd.f32 %v644, %v680
    %v687 = vrot.slane %v638, 2
    %v689 = vadd.f32 %v151, %v687
    %v690 = vxor.u32 %v689, 2147483648
    %v691 = vmul.f32 %v690, 1.442695
    %v692 = vpow.pop %v691
    %v693 = vadd.f32 %v692, 1.0
    %v694 = vrcp.pop %v693
    %v695 = vmul.f32 1.0, %v694
    %v696 = vtanh.pop %v689
    %v698 = vrot.slane %v510, 6
    %v700 = vmul.f32 %v695, %v698
    %702 = vrot.lane.b32.xlu0 %v696, 64
    %v703 = vpop.permute.xlu0 %702
    %v705 = vmul.f32 %v695, %v703
    %707 = vrot.lane.b32.xlu0 %v705, 32
    %v708 = vpop.permute.xlu0 %707
    %v710 = vadd.f32 %v700, %v708
    %v711 = vtanh.pop %v710
    %713 = vrot.lane.b32.xlu0 %v711, 64
    %v714 = vpop.permute.xlu0 %713
    %v716 = vmul.f32 %v695, %v714
    %v717 = vxor.u32 %v685, 2147483648
    %v718 = vmul.f32 %v717, 1.442695
    %v719 = vpow.pop %v718
    %v720 = vadd.f32 %v719, 1.0
    %v721 = vrcp.pop %v720
    %v722 = vmul.f32 1.0, %v721
    %v723 = vtanh.pop %v685
    %v724 = vmul.f32 %v722, %v534
    %726 = vrot.lane.b32.xlu0 %v723, 64
    %v727 = vpop.permute.xlu0 %726
    %v729 = vmul.f32 %v722, %v727
    %731 = vrot.lane.b32.xlu0 %v729, 32
    %v732 = vpop.permute.xlu0 %731
    %v734 = vadd.f32 %v724, %v732
    %v735 = vtanh.pop %v734
    %737 = vrot.lane.b32.xlu0 %v735, 64
    %v738 = vpop.permute.xlu0 %737
    %v740 = vmul.f32 %v722, %v738
    %v741 = vpack.c.bf16 %v740, %v740
    %743 = vrot.lane.b32.xlu0 %v741, 32
    %v744 = vpop.permute.xlu0 %743
    %v746 = vsel %vm112, %v744, 0
    %748 = vmatprep.subr.bf16.mxu0 0
    %749 = vmatpush1.bf16.msra.mxu0 %v329
    %750 = vmatprep.subr.bf16.mxu0 0
    %751 = vmatpush1.bf16.msra.mxu0 %v330
    %752 = vmatprep.subr.bf16.mxu0 0
    %753 = vmatpush1.bf16.msra.mxu0 0
    %754 = vmatprep.subr.bf16.mxu0 0
    %755 = vmatpush1.bf16.msra.mxu0 0
    %756 = vmatprep.subr.bf16.mxu0 0
    %757 = vmatpush1.bf16.msra.mxu0 0
    %758 = vmatprep.subr.bf16.mxu0 0
    %759 = vmatpush1.bf16.msra.mxu0 0
    %760 = vmatprep.subr.bf16.mxu0 0
    %761 = vmatpush1.bf16.msra.mxu0 0
    %762 = vmatprep.subr.bf16.mxu0 0
    %763 = vmatpush1.bf16.msra.mxu0 0
    %764 = vmatprep.subr.bf16.mxu0 0
    %765 = vmatpush1.bf16.msra.mxu0 0
    %766 = vmatprep.subr.bf16.mxu0 0
    %767 = vmatpush1.bf16.msra.mxu0 0
    %768 = vmatprep.subr.bf16.mxu0 0
    %769 = vmatpush1.bf16.msra.mxu0 0
    %770 = vmatprep.subr.bf16.mxu0 0
    %771 = vmatpush1.bf16.msra.mxu0 0
    %772 = vmatprep.subr.bf16.mxu0 0
    %773 = vmatpush1.bf16.msra.mxu0 0
    %774 = vmatprep.subr.bf16.mxu0 0
    %775 = vmatpush1.bf16.msra.mxu0 0
    %776 = vmatprep.subr.bf16.mxu0 0
    %777 = vmatpush1.bf16.msra.mxu0 0
    %778 = vmatprep.subr.bf16.mxu0 0
    %779 = vmatpush1.bf16.msra.mxu0 0
    %780 = vmatprep.mubr.bf16.mxu0 0
    %781 = vmatmul.mubr.bf16.gmra.mrb[0].mxu0 %v746
    %v782 = vpop.f32.mrb[0].mxu0
    %v783 = vadd.f32 %v316, %v782
    %v784 = vpop.f32.mrb[0].mxu0
    %v785 = vpop.f32.mrb[0].mxu0
    %v786 = vpop.f32.mrb[0].mxu0
    %787 = vdwg.mxu0
    %v788 = vxor.u32 %v783, 2147483648
    %v789 = vmul.f32 %v788, 1.442695
    %v790 = vpow.pop %v789
    %v791 = vadd.f32 %v790, 1.0
    %v792 = vrcp.pop %v791
    %v793 = vmul.f32 1.0, %v792
    %794 = vst [vmem:[%s8 + $0x4] sm:$0x3] %v793
    %v795 = vpack.c.bf16 %v716, %v716
    %v797 = vrot.slane %v795, 3
    %798 = vrot.lane.b32.xlu0 %v797, 32
    %v799 = vpop.permute.xlu0 %798
    %v801 = vsel %vm112, %v799, 0
    %803 = vmatprep.subr.bf16.mxu0 %v198
    %804 = vmatpush1.bf16.msra.mxu0 %v197
    %805 = vmatprep.subr.bf16.mxu0 %v200
    %806 = vmatpush1.bf16.msra.mxu0 %v199
    %807 = vmatprep.subr.bf16.mxu0 0
    %808 = vmatpush1.bf16.msra.mxu0 0
    %809 = vmatprep.subr.bf16.mxu0 0
    %810 = vmatpush1.bf16.msra.mxu0 0
    %811 = vmatprep.subr.bf16.mxu0 0
    %812 = vmatpush1.bf16.msra.mxu0 0
    %813 = vmatprep.subr.bf16.mxu0 0
    %814 = vmatpush1.bf16.msra.mxu0 0
    %815 = vmatprep.subr.bf16.mxu0 0
    %816 = vmatpush1.bf16.msra.mxu0 0
    %817 = vmatprep.subr.bf16.mxu0 0
    %818 = vmatpush1.bf16.msra.mxu0 0
    %819 = vmatprep.subr.bf16.mxu0 0
    %820 = vmatpush1.bf16.msra.mxu0 0
    %821 = vmatprep.subr.bf16.mxu0 0
    %822 = vmatpush1.bf16.msra.mxu0 0
    %823 = vmatprep.subr.bf16.mxu0 0
    %824 = vmatpush1.bf16.msra.mxu0 0
    %825 = vmatprep.subr.bf16.mxu0 0
    %826 = vmatpush1.bf16.msra.mxu0 0
    %827 = vmatprep.subr.bf16.mxu0 0
    %828 = vmatpush1.bf16.msra.mxu0 0
    %829 = vmatprep.subr.bf16.mxu0 0
    %830 = vmatpush1.bf16.msra.mxu0 0
    %831 = vmatprep.subr.bf16.mxu0 0
    %832 = vmatpush1.bf16.msra.mxu0 0
    %833 = vmatprep.subr.bf16.mxu0 0
    %834 = vmatpush1.bf16.msra.mxu0 0
    %835 = vmatprep.mubr.bf16.mxu0 0
    %836 = vmatmul.mubr.bf16.gmra.mrb[0].mxu0 %v801
    %v837 = vpop.f32.mrb[0].mxu0
    %v838 = vadd.f32 0.0, %v837
    %v839 = vpop.f32.mrb[0].mxu0
    %v840 = vadd.f32 0.0, %v839
    %v841 = vpop.f32.mrb[0].mxu0
    %v842 = vpop.f32.mrb[0].mxu0
    %843 = vdwg.mxu0
    %v844 = vadd.f32 %v840, %v253
    %845 = vmatprep.subr.bf16.mxu0 0
    %846 = vmatpush1.bf16.msra.mxu0 %v441
    %847 = vmatprep.subr.bf16.mxu0 0
    %848 = vmatpush1.bf16.msra.mxu0 %v442
    %849 = vmatprep.subr.bf16.mxu0 0
    %850 = vmatpush1.bf16.msra.mxu0 0
    %851 = vmatprep.subr.bf16.mxu0 0
    %852 = vmatpush1.bf16.msra.mxu0 0
    %853 = vmatprep.subr.bf16.mxu0 0
    %854 = vmatpush1.bf16.msra.mxu0 0
    %855 = vmatprep.subr.bf16.mxu0 0
    %856 = vmatpush1.bf16.msra.mxu0 0
    %857 = vmatprep.subr.bf16.mxu0 0
    %858 = vmatpush1.bf16.msra.mxu0 0
    %859 = vmatprep.subr.bf16.mxu0 0
    %860 = vmatpush1.bf16.msra.mxu0 0
    %861 = vmatprep.subr.bf16.mxu0 0
    %862 = vmatpush1.bf16.msra.mxu0 0
    %863 = vmatprep.subr.bf16.mxu0 0
    %864 = vmatpush1.bf16.msra.mxu0 0
    %865 = vmatprep.subr.bf16.mxu0 0
    %866 = vmatpush1.bf16.msra.mxu0 0
    %867 = vmatprep.subr.bf16.mxu0 0
    %868 = vmatpush1.bf16.msra.mxu0 0
    %869 = vmatprep.subr.bf16.mxu0 0
    %870 = vmatpush1.bf16.msra.mxu0 0
    %871 = vmatprep.subr.bf16.mxu0 0
    %872 = vmatpush1.bf16.msra.mxu0 0
    %873 = vmatprep.subr.bf16.mxu0 0
    %874 = vmatpush1.bf16.msra.mxu0 0
    %875 = vmatprep.subr.bf16.mxu0 0
    %876 = vmatpush1.bf16.msra.mxu0 0
    %877 = vmatprep.mubr.bf16.mxu0 0
    %878 = vmatmul.mubr.bf16.gmra.mrb[0].mxu0 %v746
    %v879 = vpop.f32.mrb[0].mxu0
    %v880 = vadd.f32 0.0, %v879
    %v881 = vpop.f32.mrb[0].mxu0
    %v882 = vpop.f32.mrb[0].mxu0
    %v883 = vpop.f32.mrb[0].mxu0
    %884 = vdwg.mxu0
    %v885 = vadd.f32 %v844, %v880
    %v886 = vadd.f32 %v154, %v838
    %v887 = vxor.u32 %v886, 2147483648
    %v888 = vmul.f32 %v887, 1.442695
    %v889 = vpow.pop %v888
    %v890 = vadd.f32 %v889, 1.0
    %v891 = vrcp.pop %v890
    %v892 = vmul.f32 1.0, %v891
    %v893 = vtanh.pop %v886
    %v895 = vrot.slane %v710, 6
    %v897 = vmul.f32 %v892, %v895
    %899 = vrot.lane.b32.xlu0 %v893, 64
    %v900 = vpop.permute.xlu0 %899
    %v902 = vmul.f32 %v892, %v900
    %904 = vrot.lane.b32.xlu0 %v902, 32
    %v905 = vpop.permute.xlu0 %904
    %v907 = vadd.f32 %v897, %v905
    %v908 = vtanh.pop %v907
    %910 = vrot.lane.b32.xlu0 %v908, 64
    %v911 = vpop.permute.xlu0 %910
    %v913 = vmul.f32 %v892, %v911
    %v914 = vxor.u32 %v885, 2147483648
    %v915 = vmul.f32 %v914, 1.442695
    %v916 = vpow.pop %v915
    %v917 = vadd.f32 %v916, 1.0
    %v918 = vrcp.pop %v917
    %v919 = vmul.f32 1.0, %v918
    %v920 = vtanh.pop %v885
    %v921 = vmul.f32 %v919, %v734
    %923 = vrot.lane.b32.xlu0 %v920, 64
    %v924 = vpop.permute.xlu0 %923
    %v926 = vmul.f32 %v919, %v924
    %928 = vrot.lane.b32.xlu0 %v926, 32
    %v929 = vpop.permute.xlu0 %928
    %v931 = vadd.f32 %v921, %v929
    %v932 = vtanh.pop %v931
    %934 = vrot.lane.b32.xlu0 %v932, 64
    %v935 = vpop.permute.xlu0 %934
    %v937 = vmul.f32 %v919, %v935
    %v938 = vpack.c.bf16 %v937, %v937
    %940 = vrot.lane.b32.xlu0 %v938, 32
    %v941 = vpop.permute.xlu0 %940
    %v943 = vsel %vm112, %v941, 0
    %945 = vmatprep.subr.bf16.mxu0 0
    %946 = vmatpush1.bf16.msra.mxu0 %v329
    %947 = vmatprep.subr.bf16.mxu0 0
    %948 = vmatpush1.bf16.msra.mxu0 %v330
    %949 = vmatprep.subr.bf16.mxu0 0
    %950 = vmatpush1.bf16.msra.mxu0 0
    %951 = vmatprep.subr.bf16.mxu0 0
    %952 = vmatpush1.bf16.msra.mxu0 0
    %953 = vmatprep.subr.bf16.mxu0 0
    %954 = vmatpush1.bf16.msra.mxu0 0
    %955 = vmatprep.subr.bf16.mxu0 0
    %956 = vmatpush1.bf16.msra.mxu0 0
    %957 = vmatprep.subr.bf16.mxu0 0
    %958 = vmatpush1.bf16.msra.mxu0 0
    %959 = vmatprep.subr.bf16.mxu0 0
    %960 = vmatpush1.bf16.msra.mxu0 0
    %961 = vmatprep.subr.bf16.mxu0 0
    %962 = vmatpush1.bf16.msra.mxu0 0
    %963 = vmatprep.subr.bf16.mxu0 0
    %964 = vmatpush1.bf16.msra.mxu0 0
    %965 = vmatprep.subr.bf16.mxu0 0
    %966 = vmatpush1.bf16.msra.mxu0 0
    %967 = vmatprep.subr.bf16.mxu0 0
    %968 = vmatpush1.bf16.msra.mxu0 0
    %969 = vmatprep.subr.bf16.mxu0 0
    %970 = vmatpush1.bf16.msra.mxu0 0
    %971 = vmatprep.subr.bf16.mxu0 0
    %972 = vmatpush1.bf16.msra.mxu0 0
    %973 = vmatprep.subr.bf16.mxu0 0
    %974 = vmatpush1.bf16.msra.mxu0 0
    %975 = vmatprep.subr.bf16.mxu0 0
    %976 = vmatpush1.bf16.msra.mxu0 0
    %977 = vmatprep.mubr.bf16.mxu0 0
    %978 = vmatmul.mubr.bf16.gmra.mrb[0].mxu0 %v943
    %v979 = vpop.f32.mrb[0].mxu0
    %v980 = vadd.f32 %v316, %v979
    %v981 = vpop.f32.mrb[0].mxu0
    %v982 = vpop.f32.mrb[0].mxu0
    %v983 = vpop.f32.mrb[0].mxu0
    %984 = vdwg.mxu0
    %v985 = vxor.u32 %v980, 2147483648
    %v986 = vmul.f32 %v985, 1.442695
    %v987 = vpow.pop %v986
    %v988 = vadd.f32 %v987, 1.0
    %v989 = vrcp.pop %v988
    %v990 = vmul.f32 1.0, %v989
    %991 = vst [vmem:[%s8 + $0x6] sm:$0x3] %v990
    %v992 = vpack.c.bf16 %v913, %v913
    %994 = vrot.lane.b32.xlu0 %v992, 32
    %v995 = vpop.permute.xlu0 %994
    %v997 = vsel %vm112, %v995, 0
    %999 = vmatprep.subr.bf16.mxu0 %v198
    %1000 = vmatpush1.bf16.msra.mxu0 %v197
    %1001 = vmatprep.subr.bf16.mxu0 %v200
    %1002 = vmatpush1.bf16.msra.mxu0 %v199
    %1003 = vmatprep.subr.bf16.mxu0 0
    %1004 = vmatpush1.bf16.msra.mxu0 0
    %1005 = vmatprep.subr.bf16.mxu0 0
    %1006 = vmatpush1.bf16.msra.mxu0 0
    %1007 = vmatprep.subr.bf16.mxu0 0
    %1008 = vmatpush1.bf16.msra.mxu0 0
    %1009 = vmatprep.subr.bf16.mxu0 0
    %1010 = vmatpush1.bf16.msra.mxu0 0
    %1011 = vmatprep.subr.bf16.mxu0 0
    %1012 = vmatpush1.bf16.msra.mxu0 0
    %1013 = vmatprep.subr.bf16.mxu0 0
    %1014 = vmatpush1.bf16.msra.mxu0 0
    %1015 = vmatprep.subr.bf16.mxu0 0
    %1016 = vmatpush1.bf16.msra.mxu0 0
    %1017 = vmatprep.subr.bf16.mxu0 0
    %1018 = vmatpush1.bf16.msra.mxu0 0
    %1019 = vmatprep.subr.bf16.mxu0 0
    %1020 = vmatpush1.bf16.msra.mxu0 0
    %1021 = vmatprep.subr.bf16.mxu0 0
    %1022 = vmatpush1.bf16.msra.mxu0 0
    %1023 = vmatprep.subr.bf16.mxu0 0
    %1024 = vmatpush1.bf16.msra.mxu0 0
    %1025 = vmatprep.subr.bf16.mxu0 0
    %1026 = vmatpush1.bf16.msra.mxu0 0
    %1027 = vmatprep.subr.bf16.mxu0 0
    %1028 = vmatpush1.bf16.msra.mxu0 0
    %1029 = vmatprep.subr.bf16.mxu0 0
    %1030 = vmatpush1.bf16.msra.mxu0 0
    %1031 = vmatprep.mubr.bf16.mxu0 0
    %1032 = vmatmul.mubr.bf16.gmra.mrb[0].mxu0 %v997
    %v1033 = vpop.f32.mrb[0].mxu0
    %v1034 = vadd.f32 0.0, %v1033
    %v1035 = vpop.f32.mrb[0].mxu0
    %v1036 = vadd.f32 0.0, %v1035
    %v1037 = vpop.f32.mrb[0].mxu0
    %v1038 = vpop.f32.mrb[0].mxu0
    %1039 = vdwg.mxu0
    %v1040 = vadd.f32 %v1036, %v253
    %1041 = vmatprep.subr.bf16.mxu0 0
    %1042 = vmatpush1.bf16.msra.mxu0 %v441
    %1043 = vmatprep.subr.bf16.mxu0 0
    %1044 = vmatpush1.bf16.msra.mxu0 %v442
    %1045 = vmatprep.subr.bf16.mxu0 0
    %1046 = vmatpush1.bf16.msra.mxu0 0
    %1047 = vmatprep.subr.bf16.mxu0 0
    %1048 = vmatpush1.bf16.msra.mxu0 0
    %1049 = vmatprep.subr.bf16.mxu0 0
    %1050 = vmatpush1.bf16.msra.mxu0 0
    %1051 = vmatprep.subr.bf16.mxu0 0
    %1052 = vmatpush1.bf16.msra.mxu0 0
    %1053 = vmatprep.subr.bf16.mxu0 0
    %1054 = vmatpush1.bf16.msra.mxu0 0
    %1055 = vmatprep.subr.bf16.mxu0 0
    %1056 = vmatpush1.bf16.msra.mxu0 0
    %1057 = vmatprep.subr.bf16.mxu0 0
    %1058 = vmatpush1.bf16.msra.mxu0 0
    %1059 = vmatprep.subr.bf16.mxu0 0
    %1060 = vmatpush1.bf16.msra.mxu0 0
    %1061 = vmatprep.subr.bf16.mxu0 0
    %1062 = vmatpush1.bf16.msra.mxu0 0
    %1063 = vmatprep.subr.bf16.mxu0 0
    %1064 = vmatpush1.bf16.msra.mxu0 0
    %1065 = vmatprep.subr.bf16.mxu0 0
    %1066 = vmatpush1.bf16.msra.mxu0 0
    %1067 = vmatprep.subr.bf16.mxu0 0
    %1068 = vmatpush1.bf16.msra.mxu0 0
    %1069 = vmatprep.subr.bf16.mxu0 0
    %1070 = vmatpush1.bf16.msra.mxu0 0
    %1071 = vmatprep.subr.bf16.mxu0 0
    %1072 = vmatpush1.bf16.msra.mxu0 0
    %1073 = vmatprep.mubr.bf16.mxu0 0
    %1074 = vmatmul.mubr.bf16.gmra.mrb[0].mxu0 %v943
    %v1075 = vpop.f32.mrb[0].mxu0
    %v1076 = vadd.f32 0.0, %v1075
    %v1077 = vpop.f32.mrb[0].mxu0
    %v1078 = vpop.f32.mrb[0].mxu0
    %v1079 = vpop.f32.mrb[0].mxu0
    %1080 = vdwg.mxu0
    %v1081 = vadd.f32 %v1040, %v1076
    %v1083 = vrot.slane %v1034, 6
    %v1085 = vadd.f32 %v154, %v1083
    %v1086 = vxor.u32 %v1085, 2147483648
    %v1087 = vmul.f32 %v1086, 1.442695
    %v1088 = vpow.pop %v1087
    %v1089 = vadd.f32 %v1088, 1.0
    %v1090 = vrcp.pop %v1089
    %v1091 = vmul.f32 1.0, %v1090
    %v1092 = vtanh.pop %v1085
    %v1094 = vrot.slane %v907, 6
    %v1096 = vmul.f32 %v1091, %v1094
    %1098 = vrot.lane.b32.xlu0 %v1092, 64
    %v1099 = vpop.permute.xlu0 %1098
    %v1101 = vmul.f32 %v1091, %v1099
    %1103 = vrot.lane.b32.xlu0 %v1101, 32
    %v1104 = vpop.permute.xlu0 %1103
    %v1106 = vadd.f32 %v1096, %v1104
    %v1107 = vtanh.pop %v1106
    %1109 = vrot.lane.b32.xlu0 %v1107, 64
    %v1110 = vpop.permute.xlu0 %1109
    %v1112 = vmul.f32 %v1091, %v1110
    %v1113 = vxor.u32 %v1081, 2147483648
    %v1114 = vmul.f32 %v1113, 1.442695
    %v1115 = vpow.pop %v1114
    %v1116 = vadd.f32 %v1115, 1.0
    %v1117 = vrcp.pop %v1116
    %v1118 = vmul.f32 1.0, %v1117
    %v1119 = vtanh.pop %v1081
    %v1120 = vmul.f32 %v1118, %v931
    %1122 = vrot.lane.b32.xlu0 %v1119, 64
    %v1123 = vpop.permute.xlu0 %1122
    %v1125 = vmul.f32 %v1118, %v1123
    %1127 = vrot.lane.b32.xlu0 %v1125, 32
    %v1128 = vpop.permute.xlu0 %1127
    %v1130 = vadd.f32 %v1120, %v1128
    %v1131 = vtanh.pop %v1130
    %1133 = vrot.lane.b32.xlu0 %v1131, 64
    %v1134 = vpop.permute.xlu0 %1133
    %v1136 = vmul.f32 %v1118, %v1134
    %v1137 = vpack.c.bf16 %v1136, %v1136
    %1139 = vrot.lane.b32.xlu0 %v1137, 32
    %v1140 = vpop.permute.xlu0 %1139
    %v1142 = vsel %vm112, %v1140, 0
    %1144 = vmatprep.subr.bf16.mxu0 0
    %1145 = vmatpush1.bf16.msra.mxu0 %v329
    %1146 = vmatprep.subr.bf16.mxu0 0
    %1147 = vmatpush1.bf16.msra.mxu0 %v330
    %1148 = vmatprep.subr.bf16.mxu0 0
    %1149 = vmatpush1.bf16.msra.mxu0 0
    %1150 = vmatprep.subr.bf16.mxu0 0
    %1151 = vmatpush1.bf16.msra.mxu0 0
    %1152 = vmatprep.subr.bf16.mxu0 0
    %1153 = vmatpush1.bf16.msra.mxu0 0
    %1154 = vmatprep.subr.bf16.mxu0 0
    %1155 = vmatpush1.bf16.msra.mxu0 0
    %1156 = vmatprep.subr.bf16.mxu0 0
    %1157 = vmatpush1.bf16.msra.mxu0 0
    %1158 = vmatprep.subr.bf16.mxu0 0
    %1159 = vmatpush1.bf16.msra.mxu0 0
    %1160 = vmatprep.subr.bf16.mxu0 0
    %1161 = vmatpush1.bf16.msra.mxu0 0
    %1162 = vmatprep.subr.bf16.mxu0 0
    %1163 = vmatpush1.bf16.msra.mxu0 0
    %1164 = vmatprep.subr.bf16.mxu0 0
    %1165 = vmatpush1.bf16.msra.mxu0 0
    %1166 = vmatprep.subr.bf16.mxu0 0
    %1167 = vmatpush1.bf16.msra.mxu0 0
    %1168 = vmatprep.subr.bf16.mxu0 0
    %1169 = vmatpush1.bf16.msra.mxu0 0
    %1170 = vmatprep.subr.bf16.mxu0 0
    %1171 = vmatpush1.bf16.msra.mxu0 0
    %1172 = vmatprep.subr.bf16.mxu0 0
    %1173 = vmatpush1.bf16.msra.mxu0 0
    %1174 = vmatprep.subr.bf16.mxu0 0
    %1175 = vmatpush1.bf16.msra.mxu0 0
    %1176 = vmatprep.mubr.bf16.mxu0 0
    %1177 = vmatmul.mubr.bf16.gmra.mrb[0].mxu0 %v1142
    %v1178 = vpop.f32.mrb[0].mxu0
    %v1179 = vadd.f32 %v316, %v1178
    %v1180 = vpop.f32.mrb[0].mxu0
    %v1181 = vpop.f32.mrb[0].mxu0
    %v1182 = vpop.f32.mrb[0].mxu0
    %1183 = vdwg.mxu0
    %v1184 = vxor.u32 %v1179, 2147483648
    %v1185 = vmul.f32 %v1184, 1.442695
    %v1186 = vpow.pop %v1185
    %v1187 = vadd.f32 %v1186, 1.0
    %v1188 = vrcp.pop %v1187
    %v1189 = vmul.f32 1.0, %v1188
    %1190 = vst [vmem:[%s8 + $0x8] sm:$0x3] %v1189
    %v1191 = vpack.c.bf16 %v1112, %v1112
    %v1193 = vrot.slane %v1191, 1
    %1194 = vrot.lane.b32.xlu0 %v1193, 32
    %v1195 = vpop.permute.xlu0 %1194
    %v1197 = vsel %vm112, %v1195, 0
    %1199 = vmatprep.subr.bf16.mxu0 %v198
    %1200 = vmatpush1.bf16.msra.mxu0 %v197
    %1201 = vmatprep.subr.bf16.mxu0 %v200
    %1202 = vmatpush1.bf16.msra.mxu0 %v199
    %1203 = vmatprep.subr.bf16.mxu0 0
    %1204 = vmatpush1.bf16.msra.mxu0 0
    %1205 = vmatprep.subr.bf16.mxu0 0
    %1206 = vmatpush1.bf16.msra.mxu0 0
    %1207 = vmatprep.subr.bf16.mxu0 0
    %1208 = vmatpush1.bf16.msra.mxu0 0
    %1209 = vmatprep.subr.bf16.mxu0 0
    %1210 = vmatpush1.bf16.msra.mxu0 0
    %1211 = vmatprep.subr.bf16.mxu0 0
    %1212 = vmatpush1.bf16.msra.mxu0 0
    %1213 = vmatprep.subr.bf16.mxu0 0
    %1214 = vmatpush1.bf16.msra.mxu0 0
    %1215 = vmatprep.subr.bf16.mxu0 0
    %1216 = vmatpush1.bf16.msra.mxu0 0
    %1217 = vmatprep.subr.bf16.mxu0 0
    %1218 = vmatpush1.bf16.msra.mxu0 0
    %1219 = vmatprep.subr.bf16.mxu0 0
    %1220 = vmatpush1.bf16.msra.mxu0 0
    %1221 = vmatprep.subr.bf16.mxu0 0
    %1222 = vmatpush1.bf16.msra.mxu0 0
    %1223 = vmatprep.subr.bf16.mxu0 0
    %1224 = vmatpush1.bf16.msra.mxu0 0
    %1225 = vmatprep.subr.bf16.mxu0 0
    %1226 = vmatpush1.bf16.msra.mxu0 0
    %1227 = vmatprep.subr.bf16.mxu0 0
    %1228 = vmatpush1.bf16.msra.mxu0 0
    %1229 = vmatprep.subr.bf16.mxu0 0
    %1230 = vmatpush1.bf16.msra.mxu0 0
    %1231 = vmatprep.mubr.bf16.mxu0 0
    %1232 = vmatmul.mubr.bf16.gmra.mrb[0].mxu0 %v1197
    %v1233 = vpop.f32.mrb[0].mxu0
    %v1234 = vadd.f32 0.0, %v1233
    %v1235 = vpop.f32.mrb[0].mxu0
    %v1236 = vadd.f32 0.0, %v1235
    %v1237 = vpop.f32.mrb[0].mxu0
    %v1238 = vpop.f32.mrb[0].mxu0
    %1239 = vdwg.mxu0
    %v1240 = vadd.f32 %v1236, %v253
    %1241 = vmatprep.subr.bf16.mxu0 0
    %1242 = vmatpush1.bf16.msra.mxu0 %v441
    %1243 = vmatprep.subr.bf16.mxu0 0
    %1244 = vmatpush1.bf16.msra.mxu0 %v442
    %1245 = vmatprep.subr.bf16.mxu0 0
    %1246 = vmatpush1.bf16.msra.mxu0 0
    %1247 = vmatprep.subr.bf16.mxu0 0
    %1248 = vmatpush1.bf16.msra.mxu0 0
    %1249 = vmatprep.subr.bf16.mxu0 0
    %1250 = vmatpush1.bf16.msra.mxu0 0
    %1251 = vmatprep.subr.bf16.mxu0 0
    %1252 = vmatpush1.bf16.msra.mxu0 0
    %1253 = vmatprep.subr.bf16.mxu0 0
    %1254 = vmatpush1.bf16.msra.mxu0 0
    %1255 = vmatprep.subr.bf16.mxu0 0
    %1256 = vmatpush1.bf16.msra.mxu0 0
    %1257 = vmatprep.subr.bf16.mxu0 0
    %1258 = vmatpush1.bf16.msra.mxu0 0
    %1259 = vmatprep.subr.bf16.mxu0 0
    %1260 = vmatpush1.bf16.msra.mxu0 0
    %1261 = vmatprep.subr.bf16.mxu0 0
    %1262 = vmatpush1.bf16.msra.mxu0 0
    %1263 = vmatprep.subr.bf16.mxu0 0
    %1264 = vmatpush1.bf16.msra.mxu0 0
    %1265 = vmatprep.subr.bf16.mxu0 0
    %1266 = vmatpush1.bf16.msra.mxu0 0
    %1267 = vmatprep.subr.bf16.mxu0 0
    %1268 = vmatpush1.bf16.msra.mxu0 0
    %1269 = vmatprep.subr.bf16.mxu0 0
    %1270 = vmatpush1.bf16.msra.mxu0 0
    %1271 = vmatprep.subr.bf16.mxu0 0
    %1272 = vmatpush1.bf16.msra.mxu0 0
    %1273 = vmatprep.mubr.bf16.mxu0 0
    %1274 = vmatmul.mubr.bf16.gmra.mrb[0].mxu0 %v1142
    %v1275 = vpop.f32.mrb[0].mxu0
    %v1276 = vadd.f32 0.0, %v1275
    %v1277 = vpop.f32.mrb[0].mxu0
    %v1278 = vpop.f32.mrb[0].mxu0
    %v1279 = vpop.f32.mrb[0].mxu0
    %1280 = vdwg.mxu0
    %v1281 = vadd.f32 %v1240, %v1276
    %v1283 = vrot.slane %v1234, 4
    %v1285 = vadd.f32 %v154, %v1283
    %v1286 = vxor.u32 %v1285, 2147483648
    %v1287 = vmul.f32 %v1286, 1.442695
    %v1288 = vpow.pop %v1287
    %v1289 = vadd.f32 %v1288, 1.0
    %v1290 = vrcp.pop %v1289
    %v1291 = vmul.f32 1.0, %v1290
    %v1292 = vtanh.pop %v1285
    %v1294 = vrot.slane %v1106, 6
    %v1296 = vmul.f32 %v1291, %v1294
    %1298 = vrot.lane.b32.xlu0 %v1292, 64
    %v1299 = vpop.permute.xlu0 %1298
    %v1301 = vmul.f32 %v1291, %v1299
    %1303 = vrot.lane.b32.xlu0 %v1301, 32
    %v1304 = vpop.permute.xlu0 %1303
    %v1306 = vadd.f32 %v1296, %v1304
    %v1307 = vtanh.pop %v1306
    %1309 = vrot.lane.b32.xlu0 %v1307, 64
    %v1310 = vpop.permute.xlu0 %1309
    %v1312 = vmul.f32 %v1291, %v1310
    %v1313 = vxor.u32 %v1281, 2147483648
    %v1314 = vmul.f32 %v1313, 1.442695
    %v1315 = vpow.pop %v1314
    %v1316 = vadd.f32 %v1315, 1.0
    %v1317 = vrcp.pop %v1316
    %v1318 = vmul.f32 1.0, %v1317
    %v1319 = vtanh.pop %v1281
    %v1320 = vmul.f32 %v1318, %v1130
    %1322 = vrot.lane.b32.xlu0 %v1319, 64
    %v1323 = vpop.permute.xlu0 %1322
    %v1325 = vmul.f32 %v1318, %v1323
    %1327 = vrot.lane.b32.xlu0 %v1325, 32
    %v1328 = vpop.permute.xlu0 %1327
    %v1330 = vadd.f32 %v1320, %v1328
    %v1331 = vtanh.pop %v1330
    %1333 = vrot.lane.b32.xlu0 %v1331, 64
    %v1334 = vpop.permute.xlu0 %1333
    %v1336 = vmul.f32 %v1318, %v1334
    %v1337 = vpack.c.bf16 %v1336, %v1336
    %1339 = vrot.lane.b32.xlu0 %v1337, 32
    %v1340 = vpop.permute.xlu0 %1339
    %v1342 = vsel %vm112, %v1340, 0
    %1344 = vmatprep.subr.bf16.mxu0 0
    %1345 = vmatpush1.bf16.msra.mxu0 %v329
    %1346 = vmatprep.subr.bf16.mxu0 0
    %1347 = vmatpush1.bf16.msra.mxu0 %v330
    %1348 = vmatprep.subr.bf16.mxu0 0
    %1349 = vmatpush1.bf16.msra.mxu0 0
    %1350 = vmatprep.subr.bf16.mxu0 0
    %1351 = vmatpush1.bf16.msra.mxu0 0
    %1352 = vmatprep.subr.bf16.mxu0 0
    %1353 = vmatpush1.bf16.msra.mxu0 0
    %1354 = vmatprep.subr.bf16.mxu0 0
    %1355 = vmatpush1.bf16.msra.mxu0 0
    %1356 = vmatprep.subr.bf16.mxu0 0
    %1357 = vmatpush1.bf16.msra.mxu0 0
    %1358 = vmatprep.subr.bf16.mxu0 0
    %1359 = vmatpush1.bf16.msra.mxu0 0
    %1360 = vmatprep.subr.bf16.mxu0 0
    %1361 = vmatpush1.bf16.msra.mxu0 0
    %1362 = vmatprep.subr.bf16.mxu0 0
    %1363 = vmatpush1.bf16.msra.mxu0 0
    %1364 = vmatprep.subr.bf16.mxu0 0
    %1365 = vmatpush1.bf16.msra.mxu0 0
    %1366 = vmatprep.subr.bf16.mxu0 0
    %1367 = vmatpush1.bf16.msra.mxu0 0
    %1368 = vmatprep.subr.bf16.mxu0 0
    %1369 = vmatpush1.bf16.msra.mxu0 0
    %1370 = vmatprep.subr.bf16.mxu0 0
    %1371 = vmatpush1.bf16.msra.mxu0 0
    %1372 = vmatprep.subr.bf16.mxu0 0
    %1373 = vmatpush1.bf16.msra.mxu0 0
    %1374 = vmatprep.subr.bf16.mxu0 0
    %1375 = vmatpush1.bf16.msra.mxu0 0
    %1376 = vmatprep.mubr.bf16.mxu0 0
    %1377 = vmatmul.mubr.bf16.gmra.mrb[0].mxu0 %v1342
    %v1378 = vpop.f32.mrb[0].mxu0
    %v1379 = vadd.f32 %v316, %v1378
    %v1380 = vpop.f32.mrb[0].mxu0
    %v1381 = vpop.f32.mrb[0].mxu0
    %v1382 = vpop.f32.mrb[0].mxu0
    %1383 = vdwg.mxu0
    %v1384 = vxor.u32 %v1379, 2147483648
    %v1385 = vmul.f32 %v1384, 1.442695
    %v1386 = vpow.pop %v1385
    %v1387 = vadd.f32 %v1386, 1.0
    %v1388 = vrcp.pop %v1387
    %v1389 = vmul.f32 1.0, %v1388
    %1390 = vst [vmem:[%s8 + $0xa] sm:$0x3] %v1389
    %v1391 = vpack.c.bf16 %v1312, %v1312
    %v1393 = vrot.slane %v1391, 2
    %1394 = vrot.lane.b32.xlu0 %v1393, 32
    %v1395 = vpop.permute.xlu0 %1394
    %v1397 = vsel %vm112, %v1395, 0
    %1399 = vmatprep.subr.bf16.mxu0 %v198
    %1400 = vmatpush1.bf16.msra.mxu0 %v197
    %1401 = vmatprep.subr.bf16.mxu0 %v200
    %1402 = vmatpush1.bf16.msra.mxu0 %v199
    %1403 = vmatprep.subr.bf16.mxu0 0
    %1404 = vmatpush1.bf16.msra.mxu0 0
    %1405 = vmatprep.subr.bf16.mxu0 0
    %1406 = vmatpush1.bf16.msra.mxu0 0
    %1407 = vmatprep.subr.bf16.mxu0 0
    %1408 = vmatpush1.bf16.msra.mxu0 0
    %1409 = vmatprep.subr.bf16.mxu0 0
    %1410 = vmatpush1.bf16.msra.mxu0 0
    %1411 = vmatprep.subr.bf16.mxu0 0
    %1412 = vmatpush1.bf16.msra.mxu0 0
    %1413 = vmatprep.subr.bf16.mxu0 0
    %1414 = vmatpush1.bf16.msra.mxu0 0
    %1415 = vmatprep.subr.bf16.mxu0 0
    %1416 = vmatpush1.bf16.msra.mxu0 0
    %1417 = vmatprep.subr.bf16.mxu0 0
    %1418 = vmatpush1.bf16.msra.mxu0 0
    %1419 = vmatprep.subr.bf16.mxu0 0
    %1420 = vmatpush1.bf16.msra.mxu0 0
    %1421 = vmatprep.subr.bf16.mxu0 0
    %1422 = vmatpush1.bf16.msra.mxu0 0
    %1423 = vmatprep.subr.bf16.mxu0 0
    %1424 = vmatpush1.bf16.msra.mxu0 0
    %1425 = vmatprep.subr.bf16.mxu0 0
    %1426 = vmatpush1.bf16.msra.mxu0 0
    %1427 = vmatprep.subr.bf16.mxu0 0
    %1428 = vmatpush1.bf16.msra.mxu0 0
    %1429 = vmatprep.subr.bf16.mxu0 0
    %1430 = vmatpush1.bf16.msra.mxu0 0
    %1431 = vmatprep.mubr.bf16.mxu0 0
    %1432 = vmatmul.mubr.bf16.gmra.mrb[0].mxu0 %v1397
    %v1433 = vpop.f32.mrb[0].mxu0
    %v1434 = vadd.f32 0.0, %v1433
    %v1435 = vpop.f32.mrb[0].mxu0
    %v1436 = vadd.f32 0.0, %v1435
    %v1437 = vpop.f32.mrb[0].mxu0
    %v1438 = vpop.f32.mrb[0].mxu0
    %1439 = vdwg.mxu0
    %v1440 = vadd.f32 %v1436, %v253
    %1441 = vmatprep.subr.bf16.mxu0 0
    %1442 = vmatpush1.bf16.msra.mxu0 %v441
    %1443 = vmatprep.subr.bf16.mxu0 0
    %1444 = vmatpush1.bf16.msra.mxu0 %v442
    %1445 = vmatprep.subr.bf16.mxu0 0
    %1446 = vmatpush1.bf16.msra.mxu0 0
    %1447 = vmatprep.subr.bf16.mxu0 0
    %1448 = vmatpush1.bf16.msra.mxu0 0
    %1449 = vmatprep.subr.bf16.mxu0 0
    %1450 = vmatpush1.bf16.msra.mxu0 0
    %1451 = vmatprep.subr.bf16.mxu0 0
    %1452 = vmatpush1.bf16.msra.mxu0 0
    %1453 = vmatprep.subr.bf16.mxu0 0
    %1454 = vmatpush1.bf16.msra.mxu0 0
    %1455 = vmatprep.subr.bf16.mxu0 0
    %1456 = vmatpush1.bf16.msra.mxu0 0
    %1457 = vmatprep.subr.bf16.mxu0 0
    %1458 = vmatpush1.bf16.msra.mxu0 0
    %1459 = vmatprep.subr.bf16.mxu0 0
    %1460 = vmatpush1.bf16.msra.mxu0 0
    %1461 = vmatprep.subr.bf16.mxu0 0
    %1462 = vmatpush1.bf16.msra.mxu0 0
    %1463 = vmatprep.subr.bf16.mxu0 0
    %1464 = vmatpush1.bf16.msra.mxu0 0
    %1465 = vmatprep.subr.bf16.mxu0 0
    %1466 = vmatpush1.bf16.msra.mxu0 0
    %1467 = vmatprep.subr.bf16.mxu0 0
    %1468 = vmatpush1.bf16.msra.mxu0 0
    %1469 = vmatprep.subr.bf16.mxu0 0
    %1470 = vmatpush1.bf16.msra.mxu0 0
    %1471 = vmatprep.subr.bf16.mxu0 0
    %1472 = vmatpush1.bf16.msra.mxu0 0
    %1473 = vmatprep.mubr.bf16.mxu0 0
    %1474 = vmatmul.mubr.bf16.gmra.mrb[0].mxu0 %v1342
    %v1475 = vpop.f32.mrb[0].mxu0
    %v1476 = vadd.f32 0.0, %v1475
    %v1477 = vpop.f32.mrb[0].mxu0
    %v1478 = vpop.f32.mrb[0].mxu0
    %v1479 = vpop.f32.mrb[0].mxu0
    %1480 = vdwg.mxu0
    %v1481 = vadd.f32 %v1440, %v1476
    %v1483 = vrot.slane %v1434, 2
    %v1485 = vadd.f32 %v154, %v1483
    %v1486 = vxor.u32 %v1485, 2147483648
    %v1487 = vmul.f32 %v1486, 1.442695
    %v1488 = vpow.pop %v1487
    %v1489 = vadd.f32 %v1488, 1.0
    %v1490 = vrcp.pop %v1489
    %v1491 = vmul.f32 1.0, %v1490
    %v1492 = vtanh.pop %v1485
    %v1494 = vrot.slane %v1306, 6
    %v1496 = vmul.f32 %v1491, %v1494
    %1498 = vrot.lane.b32.xlu0 %v1492, 64
    %v1499 = vpop.permute.xlu0 %1498
    %v1501 = vmul.f32 %v1491, %v1499
    %1503 = vrot.lane.b32.xlu0 %v1501, 32
    %v1504 = vpop.permute.xlu0 %1503
    %v1506 = vadd.f32 %v1496, %v1504
    %v1507 = vtanh.pop %v1506
    %1509 = vrot.lane.b32.xlu0 %v1507, 64
    %v1510 = vpop.permute.xlu0 %1509
    %v1512 = vmul.f32 %v1491, %v1510
    %v1513 = vxor.u32 %v1481, 2147483648
    %v1514 = vmul.f32 %v1513, 1.442695
    %v1515 = vpow.pop %v1514
    %v1516 = vadd.f32 %v1515, 1.0
    %v1517 = vrcp.pop %v1516
    %v1518 = vmul.f32 1.0, %v1517
    %v1519 = vtanh.pop %v1481
    %v1520 = vmul.f32 %v1518, %v1330
    %1522 = vrot.lane.b32.xlu0 %v1519, 64
    %v1523 = vpop.permute.xlu0 %1522
    %v1525 = vmul.f32 %v1518, %v1523
    %1527 = vrot.lane.b32.xlu0 %v1525, 32
    %v1528 = vpop.permute.xlu0 %1527
    %v1530 = vadd.f32 %v1520, %v1528
    %v1531 = vtanh.pop %v1530
    %1533 = vrot.lane.b32.xlu0 %v1531, 64
    %v1534 = vpop.permute.xlu0 %1533
    %v1536 = vmul.f32 %v1518, %v1534
    %v1537 = vpack.c.bf16 %v1536, %v1536
    %1539 = vrot.lane.b32.xlu0 %v1537, 32
    %v1540 = vpop.permute.xlu0 %1539
    %v1542 = vsel %vm112, %v1540, 0
    %1544 = vmatprep.subr.bf16.mxu0 0
    %1545 = vmatpush1.bf16.msra.mxu0 %v329
    %1546 = vmatprep.subr.bf16.mxu0 0
    %1547 = vmatpush1.bf16.msra.mxu0 %v330
    %1548 = vmatprep.subr.bf16.mxu0 0
    %1549 = vmatpush1.bf16.msra.mxu0 0
    %1550 = vmatprep.subr.bf16.mxu0 0
    %1551 = vmatpush1.bf16.msra.mxu0 0
    %1552 = vmatprep.subr.bf16.mxu0 0
    %1553 = vmatpush1.bf16.msra.mxu0 0
    %1554 = vmatprep.subr.bf16.mxu0 0
    %1555 = vmatpush1.bf16.msra.mxu0 0
    %1556 = vmatprep.subr.bf16.mxu0 0
    %1557 = vmatpush1.bf16.msra.mxu0 0
    %1558 = vmatprep.subr.bf16.mxu0 0
    %1559 = vmatpush1.bf16.msra.mxu0 0
    %1560 = vmatprep.subr.bf16.mxu0 0
    %1561 = vmatpush1.bf16.msra.mxu0 0
    %1562 = vmatprep.subr.bf16.mxu0 0
    %1563 = vmatpush1.bf16.msra.mxu0 0
    %1564 = vmatprep.subr.bf16.mxu0 0
    %1565 = vmatpush1.bf16.msra.mxu0 0
    %1566 = vmatprep.subr.bf16.mxu0 0
    %1567 = vmatpush1.bf16.msra.mxu0 0
    %1568 = vmatprep.subr.bf16.mxu0 0
    %1569 = vmatpush1.bf16.msra.mxu0 0
    %1570 = vmatprep.subr.bf16.mxu0 0
    %1571 = vmatpush1.bf16.msra.mxu0 0
    %1572 = vmatprep.subr.bf16.mxu0 0
    %1573 = vmatpush1.bf16.msra.mxu0 0
    %1574 = vmatprep.subr.bf16.mxu0 0
    %1575 = vmatpush1.bf16.msra.mxu0 0
    %1576 = vmatprep.mubr.bf16.mxu0 0
    %1577 = vmatmul.mubr.bf16.gmra.mrb[0].mxu0 %v1542
    %v1578 = vpop.f32.mrb[0].mxu0
    %v1579 = vadd.f32 %v316, %v1578
    %v1580 = vpop.f32.mrb[0].mxu0
    %v1581 = vpop.f32.mrb[0].mxu0
    %v1582 = vpop.f32.mrb[0].mxu0
    %1583 = vdwg.mxu0
    %v1584 = vxor.u32 %v1579, 2147483648
    %v1585 = vmul.f32 %v1584, 1.442695
    %v1586 = vpow.pop %v1585
    %v1587 = vadd.f32 %v1586, 1.0
    %v1588 = vrcp.pop %v1587
    %v1589 = vmul.f32 1.0, %v1588
    %1590 = vst [vmem:[%s8 + $0xc] sm:$0x3] %v1589
    %v1591 = vpack.c.bf16 %v1512, %v1512
    %v1593 = vrot.slane %v1591, 3
    %1594 = vrot.lane.b32.xlu0 %v1593, 32
    %v1595 = vpop.permute.xlu0 %1594
    %v1597 = vsel %vm112, %v1595, 0
    %1599 = vmatprep.subr.bf16.mxu0 %v198
    %1600 = vmatpush1.bf16.msra.mxu0 %v197
    %1601 = vmatprep.subr.bf16.mxu0 %v200
    %1602 = vmatpush1.bf16.msra.mxu0 %v199
    %1603 = vmatprep.subr.bf16.mxu0 0
    %1604 = vmatpush1.bf16.msra.mxu0 0
    %1605 = vmatprep.subr.bf16.mxu0 0
    %1606 = vmatpush1.bf16.msra.mxu0 0
    %1607 = vmatprep.subr.bf16.mxu0 0
    %1608 = vmatpush1.bf16.msra.mxu0 0
    %1609 = vmatprep.subr.bf16.mxu0 0
    %1610 = vmatpush1.bf16.msra.mxu0 0
    %1611 = vmatprep.subr.bf16.mxu0 0
    %1612 = vmatpush1.bf16.msra.mxu0 0
    %1613 = vmatprep.subr.bf16.mxu0 0
    %1614 = vmatpush1.bf16.msra.mxu0 0
    %1615 = vmatprep.subr.bf16.mxu0 0
    %1616 = vmatpush1.bf16.msra.mxu0 0
    %1617 = vmatprep.subr.bf16.mxu0 0
    %1618 = vmatpush1.bf16.msra.mxu0 0
    %1619 = vmatprep.subr.bf16.mxu0 0
    %1620 = vmatpush1.bf16.msra.mxu0 0
    %1621 = vmatprep.subr.bf16.mxu0 0
    %1622 = vmatpush1.bf16.msra.mxu0 0
    %1623 = vmatprep.subr.bf16.mxu0 0
    %1624 = vmatpush1.bf16.msra.mxu0 0
    %1625 = vmatprep.subr.bf16.mxu0 0
    %1626 = vmatpush1.bf16.msra.mxu0 0
    %1627 = vmatprep.subr.bf16.mxu0 0
    %1628 = vmatpush1.bf16.msra.mxu0 0
    %1629 = vmatprep.subr.bf16.mxu0 0
    %1630 = vmatpush1.bf16.msra.mxu0 0
    %1631 = vmatprep.mubr.bf16.mxu0 0
    %1632 = vmatmul.mubr.bf16.gmra.mrb[0].mxu0 %v1597
    %v1633 = vpop.f32.mrb[0].mxu0
    %v1634 = vpop.f32.mrb[0].mxu0
    %v1635 = vadd.f32 0.0, %v1634
    %v1636 = vpop.f32.mrb[0].mxu0
    %v1637 = vpop.f32.mrb[0].mxu0
    %1638 = vdwg.mxu0
    %v1639 = vadd.f32 %v1635, %v253
    %1640 = vmatprep.subr.bf16.mxu0 0
    %1641 = vmatpush1.bf16.msra.mxu0 %v441
    %1642 = vmatprep.subr.bf16.mxu0 0
    %1643 = vmatpush1.bf16.msra.mxu0 %v442
    %1644 = vmatprep.subr.bf16.mxu0 0
    %1645 = vmatpush1.bf16.msra.mxu0 0
    %1646 = vmatprep.subr.bf16.mxu0 0
    %1647 = vmatpush1.bf16.msra.mxu0 0
    %1648 = vmatprep.subr.bf16.mxu0 0
    %1649 = vmatpush1.bf16.msra.mxu0 0
    %1650 = vmatprep.subr.bf16.mxu0 0
    %1651 = vmatpush1.bf16.msra.mxu0 0
    %1652 = vmatprep.subr.bf16.mxu0 0
    %1653 = vmatpush1.bf16.msra.mxu0 0
    %1654 = vmatprep.subr.bf16.mxu0 0
    %1655 = vmatpush1.bf16.msra.mxu0 0
    %1656 = vmatprep.subr.bf16.mxu0 0
    %1657 = vmatpush1.bf16.msra.mxu0 0
    %1658 = vmatprep.subr.bf16.mxu0 0
    %1659 = vmatpush1.bf16.msra.mxu0 0
    %1660 = vmatprep.subr.bf16.mxu0 0
    %1661 = vmatpush1.bf16.msra.mxu0 0
    %1662 = vmatprep.subr.bf16.mxu0 0
    %1663 = vmatpush1.bf16.msra.mxu0 0
    %1664 = vmatprep.subr.bf16.mxu0 0
    %1665 = vmatpush1.bf16.msra.mxu0 0
    %1666 = vmatprep.subr.bf16.mxu0 0
    %1667 = vmatpush1.bf16.msra.mxu0 0
    %1668 = vmatprep.subr.bf16.mxu0 0
    %1669 = vmatpush1.bf16.msra.mxu0 0
    %1670 = vmatprep.subr.bf16.mxu0 0
    %1671 = vmatpush1.bf16.msra.mxu0 0
    %1672 = vmatprep.mubr.bf16.mxu0 0
    %1673 = vmatmul.mubr.bf16.gmra.mrb[0].mxu0 %v1542
    %v1674 = vpop.f32.mrb[0].mxu0
    %v1675 = vadd.f32 0.0, %v1674
    %v1676 = vpop.f32.mrb[0].mxu0
    %v1677 = vpop.f32.mrb[0].mxu0
    %v1678 = vpop.f32.mrb[0].mxu0
    %1679 = vdwg.mxu0
    %v1680 = vadd.f32 %v1639, %v1675
    %v1681 = vxor.u32 %v1680, 2147483648
    %v1682 = vmul.f32 %v1681, 1.442695
    %v1683 = vpow.pop %v1682
    %v1684 = vadd.f32 %v1683, 1.0
    %v1685 = vrcp.pop %v1684
    %v1686 = vmul.f32 1.0, %v1685
    %v1687 = vtanh.pop %v1680
    %v1688 = vmul.f32 %v1686, %v1530
    %1690 = vrot.lane.b32.xlu0 %v1687, 64
    %v1691 = vpop.permute.xlu0 %1690
    %v1693 = vmul.f32 %v1686, %v1691
    %1695 = vrot.lane.b32.xlu0 %v1693, 32
    %v1696 = vpop.permute.xlu0 %1695
    %v1698 = vadd.f32 %v1688, %v1696
    %v1699 = vtanh.pop %v1698
    %1701 = vrot.lane.b32.xlu0 %v1699, 64
    %v1702 = vpop.permute.xlu0 %1701
    %v1704 = vmul.f32 %v1686, %v1702
    %v1705 = vpack.c.bf16 %v1704, %v1704
    %1707 = vrot.lane.b32.xlu0 %v1705, 32
    %v1708 = vpop.permute.xlu0 %1707
    %v1710 = vsel %vm112, %v1708, 0
    %1712 = vmatprep.subr.bf16.mxu0 0
    %1713 = vmatpush1.bf16.msra.mxu0 %v329
    %1714 = vmatprep.subr.bf16.mxu0 0
    %1715 = vmatpush1.bf16.msra.mxu0 %v330
    %1716 = vmatprep.subr.bf16.mxu0 0
    %1717 = vmatpush1.bf16.msra.mxu0 0
    %1718 = vmatprep.subr.bf16.mxu0 0
    %1719 = vmatpush1.bf16.msra.mxu0 0
    %1720 = vmatprep.subr.bf16.mxu0 0
    %1721 = vmatpush1.bf16.msra.mxu0 0
    %1722 = vmatprep.subr.bf16.mxu0 0
    %1723 = vmatpush1.bf16.msra.mxu0 0
    %1724 = vmatprep.subr.bf16.mxu0 0
    %1725 = vmatpush1.bf16.msra.mxu0 0
    %1726 = vmatprep.subr.bf16.mxu0 0
    %1727 = vmatpush1.bf16.msra.mxu0 0
    %1728 = vmatprep.subr.bf16.mxu0 0
    %1729 = vmatpush1.bf16.msra.mxu0 0
    %1730 = vmatprep.subr.bf16.mxu0 0
    %1731 = vmatpush1.bf16.msra.mxu0 0
    %1732 = vmatprep.subr.bf16.mxu0 0
    %1733 = vmatpush1.bf16.msra.mxu0 0
    %1734 = vmatprep.subr.bf16.mxu0 0
    %1735 = vmatpush1.bf16.msra.mxu0 0
    %1736 = vmatprep.subr.bf16.mxu0 0
    %1737 = vmatpush1.bf16.msra.mxu0 0
    %1738 = vmatprep.subr.bf16.mxu0 0
    %1739 = vmatpush1.bf16.msra.mxu0 0
    %1740 = vmatprep.subr.bf16.mxu0 0
    %1741 = vmatpush1.bf16.msra.mxu0 0
    %1742 = vmatprep.subr.bf16.mxu0 0
    %1743 = vmatpush1.bf16.msra.mxu0 0
    %1744 = vmatprep.mubr.bf16.mxu0 0
    %1745 = vmatmul.mubr.bf16.gmra.mrb[0].mxu0 %v1710
    %v1746 = vpop.f32.mrb[0].mxu0
    %v1747 = vadd.f32 %v316, %v1746
    %v1748 = vpop.f32.mrb[0].mxu0
    %v1749 = vpop.f32.mrb[0].mxu0
    %v1750 = vpop.f32.mrb[0].mxu0
    %1751 = vdwg.mxu0
    %v1752 = vxor.u32 %v1747, 2147483648
    %v1753 = vmul.f32 %v1752, 1.442695
    %v1754 = vpow.pop %v1753
    %v1755 = vadd.f32 %v1754, 1.0
    %v1756 = vrcp.pop %v1755
    %v1757 = vmul.f32 1.0, %v1756
    %1758 = vst [vmem:[%s8 + $0xe] sm:$0x3] %v1757
    // Predicated region
    $region42: #{lstm_head_forward.1} parent=1 // pred_check
      _
    $region43: #{lstm_head_forward.1} parent=1 // pred_check_branch
      %1760 = sbr.rel (0) target = $region45
    $region44: #{lstm_head_forward.1} parent=1 // pred_region
      _
    $region45: #{lstm_head_forward.1} parent=1 // pred_fallthru
      _
    // Predicated region
    $region46: #{lstm_head_forward.1} parent=1 // pred_check
      _
    $region47: #{lstm_head_forward.1} parent=1 // pred_check_branch
      %1762 = sbr.rel (0) target = $region49
    $region48: #{lstm_head_forward.1} parent=1 // pred_region
      _
    $region49: #{lstm_head_forward.1} parent=1 // pred_fallthru
      _
    %1763 = vsyncpa [#allocation3], 1
    %1764 = vsyncpa [#allocation5], 1

</llo_original>
